<compile_context>
chip_gen: v7x
topology: tpu7x:2x2x1
jax: 0.10.0
libtpu: 0.0.40
codegen_flags: <defaults>
</compile_context>

<pallas_src>
import functools

import jax
import jax.numpy as jnp
from jax import lax
from jax.experimental import pallas as pl
from jax.experimental.pallas import tpu as pltpu


def _round_up(x: int, m: int) -> int:
    return (x + m - 1) // m * m


def _vmem_limit_bytes() -> int:
    """Generation-aware scoped-VMEM limit (v5e/v6e ~96 MiB, v7x ~48 MiB)."""
    try:
        phys = pltpu.get_tpu_info().vmem_capacity_bytes
        return int(min(100 * 1024 * 1024, phys * 3 // 4))
    except Exception:
        return 48 * 1024 * 1024


def fasttext_kernel(ids_ref, table_ref, w1_ref, b1_ref, w2_ref, b2_ref,
                    prob_ref, relu_ref, pooled_ref, *, seq_len: int,
                    inv_len: float):
    # ids_ref   : (Bp, L) int32 in SMEM (scalar prefetch)
    # table_ref : (Vp, Ep) f32   -- embedding table, VMEM-resident
    # w1_ref    : (Ep, Hp), b1_ref: (1, Hp) f32
    # w2_ref    : (Hp, Cp), b2_ref: (1, Cp) f32 (padded cols pre-set to -1e30)
    # pooled_ref: (TB, Ep) f32 scratch
    tb = prob_ref.shape[0]
    ep = table_ref.shape[1]
    base = pl.program_id(0) * tb

    unroll_tokens = seq_len <= 32

    # Mean-pooled embeddings via in-kernel row gather: for each example, sum
    # exactly L table rows (indices read from SMEM) and scale by 1/L.  The
    # (B, L, E) gathered slab is never materialized anywhere.
    def _gather_row(b, carry):
        row = base + b

        def _accum(l, acc):
            tok = ids_ref[row, l]
            return acc + table_ref[pl.ds(tok, 1), :]

        pooled_row = lax.fori_loop(0, seq_len, _accum,
                                   jnp.zeros((1, ep), jnp.float32),
                                   unroll=unroll_tokens)
        pooled_ref[pl.ds(b, 1), :] = pooled_row * inv_len
        return carry

    lax.fori_loop(0, tb, _gather_row, 0)

    pooled = pooled_ref[...]                                      # (TB, Ep) f32

    # fc1 + relu (bf16 operands by default, f32 accumulation, f32 bias).
    h = jnp.dot(pooled.astype(w1_ref.dtype), w1_ref[...],
                preferred_element_type=jnp.float32) + b1_ref[...]  # (TB, Hp)
    h_relu = jnp.maximum(h, 0.0)

    # fc2.  Padded class columns are masked via the -1e30 entries already
    # baked into b2 (w2 padded cols are zero), so no in-kernel iota/select.
    logits = jnp.dot(h_relu.astype(w2_ref.dtype), w2_ref[...],
                     preferred_element_type=jnp.float32) + b2_ref[...]  # (TB, Cp)

    # Numerically-stable softmax; approx reciprocal (EUP) + one Newton step.
    m = jnp.max(logits, axis=-1, keepdims=True)
    e = jnp.exp(logits - m)
    s = jnp.sum(e, axis=-1, keepdims=True)
    inv = pl.reciprocal(s, approx=True)
    inv = inv * (2.0 - s * inv)

    prob_ref[...] = (e * inv).astype(prob_ref.dtype)
    relu_ref[...] = h_relu.astype(relu_ref.dtype)


def fasttext_forward(input_ids, embedding_table, w1, b1, w2, b2,
                     *, batch_tile: int = 256,
                     compute_dtype=jnp.bfloat16,
                     table_dtype=jnp.float32):
    """input_ids: (B, L) int32.

    Returns [softmax_probs (B, C) f32, relu_hidden (B, H) f32] — same as the
    PyTorch module's forward (dropout is an inference no-op).
    """
    B, L = input_ids.shape
    V, E = embedding_table.shape
    H = w1.shape[-1]
    C = w2.shape[-1]

    # Padded sizes: lane dims to multiples of 128 (lane-dense, unmasked vst);
    # table rows only need sublane (8) alignment since they are gathered.
    Vp = _round_up(V, 8)
    Ep = _round_up(E, 128)
    Hp = _round_up(H, 128)
    Cp = _round_up(C, 128)

    # Batch tile: multiple of 8 sublanes, capped at batch_tile (<= MXU row
    # dim), and no larger than half the batch (rounded up) so the grid has
    # >= 2 steps whenever B permits — keeps both v7x TensorCores busy.
    TB = min(batch_tile, max(8, _round_up((B + 1) // 2, 8)))
    Bp = _round_up(B, TB)
    grid = (Bp // TB,)

    # Token ids: scalar-prefetched into SMEM.  Padded batch rows point at
    # token 0 (valid row); their outputs are sliced away below.
    ids_p = jnp.pad(input_ids.astype(jnp.int32), ((0, Bp - B), (0, 0)))

    table_p = jnp.pad(embedding_table.astype(jnp.float32),
                      ((0, Vp - V), (0, Ep - E))).astype(table_dtype)
    w1_p = jnp.pad(jnp.asarray(w1, jnp.float32),
                   ((0, Ep - E), (0, Hp - H))).astype(compute_dtype)
    b1_p = jnp.pad(jnp.asarray(b1, jnp.float32).reshape(1, -1),
                   ((0, 0), (0, Hp - H)))
    w2_p = jnp.pad(jnp.asarray(w2, jnp.float32),
                   ((0, Hp - H), (0, Cp - C))).astype(compute_dtype)
    # Fold the padded-class mask into the bias: padded columns get -1e30, so
    # they vanish in the softmax without any in-kernel masking.
    b2_p = jnp.full((1, Cp), -1e30, jnp.float32)
    b2_p = b2_p.at[:, :C].set(jnp.asarray(b2, jnp.float32).reshape(1, -1))

    kernel = functools.partial(fasttext_kernel, seq_len=L, inv_len=1.0 / L)

    resident_map = lambda i, ids: (0, 0)   # weights stay VMEM-resident
    tile_map = lambda i, ids: (i, 0)       # outputs tiled over batch
    vmem_limit = _vmem_limit_bytes()

    def _build(single_buffer_weights: bool):
        def resident_spec(shape):
            if single_buffer_weights:
                # Constant index_map -> a second pipeline buffer is pure waste.
                return pl.BlockSpec(shape, resident_map,
                                    pipeline_mode=pl.Buffered(1))
            return pl.BlockSpec(shape, resident_map)

        return pl.pallas_call(
            kernel,
            out_shape=(
                jax.ShapeDtypeStruct((Bp, Cp), jnp.float32),
                jax.ShapeDtypeStruct((Bp, Hp), jnp.float32),
            ),
            grid_spec=pltpu.PrefetchScalarGridSpec(
                num_scalar_prefetch=1,          # input_ids -> SMEM
                grid=grid,
                in_specs=[
                    resident_spec((Vp, Ep)),    # embedding table
                    resident_spec((Ep, Hp)),    # w1
                    resident_spec((1, Hp)),     # b1
                    resident_spec((Hp, Cp)),    # w2
                    resident_spec((1, Cp)),     # b2 (with -1e30 pad columns)
                ],
                out_specs=(
                    pl.BlockSpec((TB, Cp), tile_map),   # softmax probs
                    pl.BlockSpec((TB, Hp), tile_map),   # relu hidden
                ),
                scratch_shapes=[pltpu.VMEM((TB, Ep), jnp.float32)],
            ),
            compiler_params=pltpu.CompilerParams(
                dimension_semantics=("parallel",),
                vmem_limit_bytes=vmem_limit,
            ),
        )

    try:
        prob_p, relu_p = _build(True)(ids_p, table_p, w1_p, b1_p, w2_p, b2_p)
    except Exception:
        # Fallback for Pallas versions without BlockSpec.pipeline_mode support.
        prob_p, relu_p = _build(False)(ids_p, table_p, w1_p, b1_p, w2_p, b2_p)

    # Slice away batch / lane padding.
    return [prob_p[:B, :C], relu_p[:B, :H]]


if __name__ == "__main__":
    # Small config consistent with the module's __init__:
    n_vocab = 50
    embed = 32          # config.embed
    hidden_size = 32    # config.hidden_size
    num_classes = 8     # config.num_classes
    B, L = 8, 16        # batch, sequence length

    key = jax.random.PRNGKey(0)
    k_emb, k_w1, k_b1, k_w2, k_b2, k_ids = jax.random.split(key, 6)

    # Deterministic parameter init (shapes match nn.Embedding / nn.Linear).
    embedding_table = jax.random.normal(k_emb, (n_vocab, embed), jnp.float32) * 0.1
    embedding_table = embedding_table.at[n_vocab - 1].set(0.0)  # padding_idx row

    # nn.Linear stores (out, in); we store transposed (in, out) for x @ W.
    w1 = jax.random.normal(k_w1, (embed, hidden_size), jnp.float32) * 0.1
    b1 = jax.random.normal(k_b1, (1, hidden_size), jnp.float32) * 0.1
    w2 = jax.random.normal(k_w2, (hidden_size, num_classes), jnp.float32) * 0.1
    b2 = jax.random.normal(k_b2, (1, num_classes), jnp.float32) * 0.1

    input_ids = jax.random.randint(k_ids, (B, L), 0, n_vocab, dtype=jnp.int32)
    attention_mask = jnp.ones((B, L), jnp.int32)  # unused by forward, kept for parity

    prob, relu_out = fasttext_forward(input_ids, embedding_table, w1, b1, w2, b2)
    jax.block_until_ready((prob, relu_out))

    # Reference check in plain f32 JAX (matches the PyTorch forward).  The
    # kernel uses bf16 matmul operands (f32 accumulation) per the perf review,
    # so the tolerance reflects expected bf16 quantization, not a bug.
    emb_ref = jnp.take(embedding_table, input_ids, axis=0).mean(axis=1)
    h_ref = jnp.maximum(emb_ref @ w1 + b1, 0.0)
    logits_ref = h_ref @ w2 + b2
    prob_ref = jax.nn.softmax(logits_ref, axis=-1)
    assert jnp.allclose(prob, prob_ref, atol=2e-2), "softmax output mismatch"
    assert jnp.allclose(relu_out, h_ref, atol=2e-2), "relu hidden mismatch"
    assert bool(jnp.all(jnp.isfinite(prob))) and bool(jnp.all(jnp.isfinite(relu_out)))

    print("KERNEL_OK")
</pallas_src>

<mosaic_0001>
module attributes {stable_mosaic.version = 11 : i64} {
  func.func @fasttext_kernel(%arg0: i32, %arg1: memref<8x16xi32, #tpu.memory_space<smem>>, %arg2: memref<56x128xf32, #tpu.memory_space<vmem>>, %arg3: memref<128x128xbf16, #tpu.memory_space<vmem>>, %arg4: memref<1x128xf32, #tpu.memory_space<vmem>>, %arg5: memref<128x128xbf16, #tpu.memory_space<vmem>>, %arg6: memref<1x128xf32, #tpu.memory_space<vmem>>, %arg7: memref<8x128xf32, #tpu.memory_space<vmem>>, %arg8: memref<8x128xf32, #tpu.memory_space<vmem>>, %arg9: memref<8x128xf32, #tpu.memory_space<vmem>>) attributes {dimension_semantics = [#tpu.dimension_semantics<parallel>], iteration_bounds = array<i64: 1>, scalar_prefetch = 1 : i64, scratch_operands = 1 : i64, tpu.core_type = #tpu.core_type<tc>, window_params = [{pipeline_mode = #tpu.pipeline_mode<synchronous>, transform_indices = @transform_0, window_bounds = array<i64: 56, 128>}, {pipeline_mode = #tpu.pipeline_mode<synchronous>, transform_indices = @transform_1, window_bounds = array<i64: 128, 128>}, {pipeline_mode = #tpu.pipeline_mode<synchronous>, transform_indices = @transform_2, window_bounds = array<i64: 1, 128>}, {pipeline_mode = #tpu.pipeline_mode<synchronous>, transform_indices = @transform_3, window_bounds = array<i64: 128, 128>}, {pipeline_mode = #tpu.pipeline_mode<synchronous>, transform_indices = @transform_4, window_bounds = array<i64: 1, 128>}, {transform_indices = @transform_5, window_bounds = array<i64: 8, 128>}, {transform_indices = @transform_6, window_bounds = array<i64: 8, 128>}]} {
    %c8_i32 = arith.constant 8 : i32
    %0 = arith.muli %arg0, %c8_i32 : i32
    %c0_i32 = arith.constant 0 : i32
    %c8_i32_0 = arith.constant 8 : i32
    %1 = arith.addi %c0_i32, %c8_i32_0 : i32
    %c1_i32 = arith.constant 1 : i32
    scf.for %arg10 = %c0_i32 to %1 step %c1_i32  : i32 {
      %33 = arith.addi %0, %arg10 : i32
      %cst_20 = arith.constant 0.000000e+00 : f32
      %34 = vector.broadcast %cst_20 : f32 to vector<1x128xf32>
      %c0_i32_21 = arith.constant 0 : i32
      %35 = arith.index_cast %33 : i32 to index
      %36 = arith.index_cast %c0_i32_21 : i32 to index
      %37 = memref.load %arg1[%35, %36] : memref<8x16xi32, #tpu.memory_space<smem>>
      %38 = arith.index_cast %37 : i32 to index
      %c0_22 = arith.constant 0 : index
      %39 = vector.load %arg2[%38, %c0_22] : memref<56x128xf32, #tpu.memory_space<vmem>>, vector<1x128xf32>
      %40 = arith.addf %34, %39 : vector<1x128xf32>
      %c1_i32_23 = arith.constant 1 : i32
      %41 = arith.index_cast %33 : i32 to index
      %42 = arith.index_cast %c1_i32_23 : i32 to index
      %43 = memref.load %arg1[%41, %42] : memref<8x16xi32, #tpu.memory_space<smem>>
      %44 = arith.index_cast %43 : i32 to index
      %c0_24 = arith.constant 0 : index
      %45 = vector.load %arg2[%44, %c0_24] : memref<56x128xf32, #tpu.memory_space<vmem>>, vector<1x128xf32>
      %46 = arith.addf %40, %45 : vector<1x128xf32>
      %c2_i32 = arith.constant 2 : i32
      %47 = arith.index_cast %33 : i32 to index
      %48 = arith.index_cast %c2_i32 : i32 to index
      %49 = memref.load %arg1[%47, %48] : memref<8x16xi32, #tpu.memory_space<smem>>
      %50 = arith.index_cast %49 : i32 to index
      %c0_25 = arith.constant 0 : index
      %51 = vector.load %arg2[%50, %c0_25] : memref<56x128xf32, #tpu.memory_space<vmem>>, vector<1x128xf32>
      %52 = arith.addf %46, %51 : vector<1x128xf32>
      %c3_i32 = arith.constant 3 : i32
      %53 = arith.index_cast %33 : i32 to index
      %54 = arith.index_cast %c3_i32 : i32 to index
      %55 = memref.load %arg1[%53, %54] : memref<8x16xi32, #tpu.memory_space<smem>>
      %56 = arith.index_cast %55 : i32 to index
      %c0_26 = arith.constant 0 : index
      %57 = vector.load %arg2[%56, %c0_26] : memref<56x128xf32, #tpu.memory_space<vmem>>, vector<1x128xf32>
      %58 = arith.addf %52, %57 : vector<1x128xf32>
      %c4_i32 = arith.constant 4 : i32
      %59 = arith.index_cast %33 : i32 to index
      %60 = arith.index_cast %c4_i32 : i32 to index
      %61 = memref.load %arg1[%59, %60] : memref<8x16xi32, #tpu.memory_space<smem>>
      %62 = arith.index_cast %61 : i32 to index
      %c0_27 = arith.constant 0 : index
      %63 = vector.load %arg2[%62, %c0_27] : memref<56x128xf32, #tpu.memory_space<vmem>>, vector<1x128xf32>
      %64 = arith.addf %58, %63 : vector<1x128xf32>
      %c5_i32 = arith.constant 5 : i32
      %65 = arith.index_cast %33 : i32 to index
      %66 = arith.index_cast %c5_i32 : i32 to index
      %67 = memref.load %arg1[%65, %66] : memref<8x16xi32, #tpu.memory_space<smem>>
      %68 = arith.index_cast %67 : i32 to index
      %c0_28 = arith.constant 0 : index
      %69 = vector.load %arg2[%68, %c0_28] : memref<56x128xf32, #tpu.memory_space<vmem>>, vector<1x128xf32>
      %70 = arith.addf %64, %69 : vector<1x128xf32>
      %c6_i32 = arith.constant 6 : i32
      %71 = arith.index_cast %33 : i32 to index
      %72 = arith.index_cast %c6_i32 : i32 to index
      %73 = memref.load %arg1[%71, %72] : memref<8x16xi32, #tpu.memory_space<smem>>
      %74 = arith.index_cast %73 : i32 to index
      %c0_29 = arith.constant 0 : index
      %75 = vector.load %arg2[%74, %c0_29] : memref<56x128xf32, #tpu.memory_space<vmem>>, vector<1x128xf32>
      %76 = arith.addf %70, %75 : vector<1x128xf32>
      %c7_i32 = arith.constant 7 : i32
      %77 = arith.index_cast %33 : i32 to index
      %78 = arith.index_cast %c7_i32 : i32 to index
      %79 = memref.load %arg1[%77, %78] : memref<8x16xi32, #tpu.memory_space<smem>>
      %80 = arith.index_cast %79 : i32 to index
      %c0_30 = arith.constant 0 : index
      %81 = vector.load %arg2[%80, %c0_30] : memref<56x128xf32, #tpu.memory_space<vmem>>, vector<1x128xf32>
      %82 = arith.addf %76, %81 : vector<1x128xf32>
      %c8_i32_31 = arith.constant 8 : i32
      %83 = arith.index_cast %33 : i32 to index
      %84 = arith.index_cast %c8_i32_31 : i32 to index
      %85 = memref.load %arg1[%83, %84] : memref<8x16xi32, #tpu.memory_space<smem>>
      %86 = arith.index_cast %85 : i32 to index
      %c0_32 = arith.constant 0 : index
      %87 = vector.load %arg2[%86, %c0_32] : memref<56x128xf32, #tpu.memory_space<vmem>>, vector<1x128xf32>
      %88 = arith.addf %82, %87 : vector<1x128xf32>
      %c9_i32 = arith.constant 9 : i32
      %89 = arith.index_cast %33 : i32 to index
      %90 = arith.index_cast %c9_i32 : i32 to index
      %91 = memref.load %arg1[%89, %90] : memref<8x16xi32, #tpu.memory_space<smem>>
      %92 = arith.index_cast %91 : i32 to index
      %c0_33 = arith.constant 0 : index
      %93 = vector.load %arg2[%92, %c0_33] : memref<56x128xf32, #tpu.memory_space<vmem>>, vector<1x128xf32>
      %94 = arith.addf %88, %93 : vector<1x128xf32>
      %c10_i32 = arith.constant 10 : i32
      %95 = arith.index_cast %33 : i32 to index
      %96 = arith.index_cast %c10_i32 : i32 to index
      %97 = memref.load %arg1[%95, %96] : memref<8x16xi32, #tpu.memory_space<smem>>
      %98 = arith.index_cast %97 : i32 to index
      %c0_34 = arith.constant 0 : index
      %99 = vector.load %arg2[%98, %c0_34] : memref<56x128xf32, #tpu.memory_space<vmem>>, vector<1x128xf32>
      %100 = arith.addf %94, %99 : vector<1x128xf32>
      %c11_i32 = arith.constant 11 : i32
      %101 = arith.index_cast %33 : i32 to index
      %102 = arith.index_cast %c11_i32 : i32 to index
      %103 = memref.load %arg1[%101, %102] : memref<8x16xi32, #tpu.memory_space<smem>>
      %104 = arith.index_cast %103 : i32 to index
      %c0_35 = arith.constant 0 : index
      %105 = vector.load %arg2[%104, %c0_35] : memref<56x128xf32, #tpu.memory_space<vmem>>, vector<1x128xf32>
      %106 = arith.addf %100, %105 : vector<1x128xf32>
      %c12_i32 = arith.constant 12 : i32
      %107 = arith.index_cast %33 : i32 to index
      %108 = arith.index_cast %c12_i32 : i32 to index
      %109 = memref.load %arg1[%107, %108] : memref<8x16xi32, #tpu.memory_space<smem>>
      %110 = arith.index_cast %109 : i32 to index
      %c0_36 = arith.constant 0 : index
      %111 = vector.load %arg2[%110, %c0_36] : memref<56x128xf32, #tpu.memory_space<vmem>>, vector<1x128xf32>
      %112 = arith.addf %106, %111 : vector<1x128xf32>
      %c13_i32 = arith.constant 13 : i32
      %113 = arith.index_cast %33 : i32 to index
      %114 = arith.index_cast %c13_i32 : i32 to index
      %115 = memref.load %arg1[%113, %114] : memref<8x16xi32, #tpu.memory_space<smem>>
      %116 = arith.index_cast %115 : i32 to index
      %c0_37 = arith.constant 0 : index
      %117 = vector.load %arg2[%116, %c0_37] : memref<56x128xf32, #tpu.memory_space<vmem>>, vector<1x128xf32>
      %118 = arith.addf %112, %117 : vector<1x128xf32>
      %c14_i32 = arith.constant 14 : i32
      %119 = arith.index_cast %33 : i32 to index
      %120 = arith.index_cast %c14_i32 : i32 to index
      %121 = memref.load %arg1[%119, %120] : memref<8x16xi32, #tpu.memory_space<smem>>
      %122 = arith.index_cast %121 : i32 to index
      %c0_38 = arith.constant 0 : index
      %123 = vector.load %arg2[%122, %c0_38] : memref<56x128xf32, #tpu.memory_space<vmem>>, vector<1x128xf32>
      %124 = arith.addf %118, %123 : vector<1x128xf32>
      %c15_i32 = arith.constant 15 : i32
      %125 = arith.index_cast %33 : i32 to index
      %126 = arith.index_cast %c15_i32 : i32 to index
      %127 = memref.load %arg1[%125, %126] : memref<8x16xi32, #tpu.memory_space<smem>>
      %128 = arith.index_cast %127 : i32 to index
      %c0_39 = arith.constant 0 : index
      %129 = vector.load %arg2[%128, %c0_39] : memref<56x128xf32, #tpu.memory_space<vmem>>, vector<1x128xf32>
      %130 = arith.addf %124, %129 : vector<1x128xf32>
      %c16_i32 = arith.constant 16 : i32
      %cst_40 = arith.constant 6.250000e-02 : f32
      %131 = vector.broadcast %cst_40 : f32 to vector<1x128xf32>
      %132 = arith.mulf %130, %131 : vector<1x128xf32>
      %133 = arith.index_cast %arg10 : i32 to index
      %c0_41 = arith.constant 0 : index
      %134 = vector.load %arg9[%133, %c0_41] : memref<8x128xf32, #tpu.memory_space<vmem>>, vector<1x128xf32>
      tpu.vector_store %arg9[%133, %c0_41], %132 {strides = array<i32>} : memref<8x128xf32, #tpu.memory_space<vmem>>, vector<1x128xf32>,
    }
    %c8_i32_1 = arith.constant 8 : i32
    %c0 = arith.constant 0 : index
    %c0_2 = arith.constant 0 : index
    %2 = vector.load %arg9[%c0, %c0_2] : memref<8x128xf32, #tpu.memory_space<vmem>>, vector<8x128xf32>
    %3 = arith.truncf %2 : vector<8x128xf32> to vector<8x128xbf16>
    %c0_3 = arith.constant 0 : index
    %c0_4 = arith.constant 0 : index
    %4 = vector.load %arg3[%c0_3, %c0_4] : memref<128x128xbf16, #tpu.memory_space<vmem>>, vector<128x128xbf16>
    %cst = arith.constant dense<0.000000e+00> : vector<8x128xf32>
    %5 = tpu.matmul %3, %4, %cst {dimension_numbers = #tpu.dot_dimension_numbers<[1], [0], [0], [1], [0, 0, 1, 1], [], []>} : vector<8x128xbf16>, vector<128x128xbf16>, vector<8x128xf32> -> vector<8x128xf32>
    %c0_5 = arith.constant 0 : index
    %c0_6 = arith.constant 0 : index
    %6 = vector.load %arg4[%c0_5, %c0_6] : memref<1x128xf32, #tpu.memory_space<vmem>>, vector<1x128xf32>
    %7 = vector.broadcast %6 : vector<1x128xf32> to vector<8x128xf32>
    %8 = arith.addf %5, %7 : vector<8x128xf32>
    %cst_7 = arith.constant 0.000000e+00 : f32
    %9 = vector.broadcast %cst_7 : f32 to vector<8x128xf32>
    %10 = arith.maximumf %8, %9 : vector<8x128xf32>
    %11 = arith.truncf %10 : vector<8x128xf32> to vector<8x128xbf16>
    %c0_8 = arith.constant 0 : index
    %c0_9 = arith.constant 0 : index
    %12 = vector.load %arg5[%c0_8, %c0_9] : memref<128x128xbf16, #tpu.memory_space<vmem>>, vector<128x128xbf16>
    %cst_10 = arith.constant dense<0.000000e+00> : vector<8x128xf32>
    %13 = tpu.matmul %11, %12, %cst_10 {dimension_numbers = #tpu.dot_dimension_numbers<[1], [0], [0], [1], [0, 0, 1, 1], [], []>} : vector<8x128xbf16>, vector<128x128xbf16>, vector<8x128xf32> -> vector<8x128xf32>
    %c0_11 = arith.constant 0 : index
    %c0_12 = arith.constant 0 : index
    %14 = vector.load %arg6[%c0_11, %c0_12] : memref<1x128xf32, #tpu.memory_space<vmem>>, vector<1x128xf32>
    %15 = vector.broadcast %14 : vector<1x128xf32> to vector<8x128xf32>
    %16 = arith.addf %13, %15 : vector<8x128xf32>
    %cst_13 = arith.constant dense<0xFF800000> : vector<8xf32>
    %17 = vector.multi_reduction <maximumf>, %16, %cst_13 [1] : vector<8x128xf32> to vector<8xf32>
    %18 = vector.shape_cast %17 : vector<8xf32> to vector<8x1xf32>
    %19 = vector.broadcast %18 : vector<8x1xf32> to vector<8x128xf32>
    %20 = arith.subf %16, %19 : vector<8x128xf32>
    %21 = math.exp %20 : vector<8x128xf32>
    %cst_14 = arith.constant dense<0.000000e+00> : vector<8xf32>
    %22 = vector.multi_reduction <add>, %21, %cst_14 [1] : vector<8x128xf32> to vector<8xf32>
    %23 = vector.shape_cast %22 : vector<8xf32> to vector<8x1xf32>
    %24 = tpu.reciprocal %23 {approx = true} : vector<8x1xf32> -> vector<8x1xf32>
    %25 = arith.mulf %23, %24 : vector<8x1xf32>
    %cst_15 = arith.constant 2.000000e+00 : f32
    %26 = vector.broadcast %cst_15 : f32 to vector<8x1xf32>
    %27 = arith.subf %26, %25 : vector<8x1xf32>
    %28 = arith.mulf %24, %27 : vector<8x1xf32>
    %29 = vector.broadcast %28 : vector<8x1xf32> to vector<8x128xf32>
    %30 = arith.mulf %21, %29 : vector<8x128xf32>
    %c0_16 = arith.constant 0 : index
    %c0_17 = arith.constant 0 : index
    %31 = vector.load %arg7[%c0_16, %c0_17] : memref<8x128xf32, #tpu.memory_space<vmem>>, vector<8x128xf32>
    tpu.vector_store %arg7[%c0_16, %c0_17], %30 {strides = array<i32>} : memref<8x128xf32, #tpu.memory_space<vmem>>, vector<8x128xf32>,
    %c0_18 = arith.constant 0 : index
    %c0_19 = arith.constant 0 : index
    %32 = vector.load %arg8[%c0_18, %c0_19] : memref<8x128xf32, #tpu.memory_space<vmem>>, vector<8x128xf32>
    tpu.vector_store %arg8[%c0_18, %c0_19], %10 {strides = array<i32>} : memref<8x128xf32, #tpu.memory_space<vmem>>, vector<8x128xf32>,
    return
  }
  func.func @transform_0(%arg0: i32, %arg1: memref<8x16xi32, #tpu.memory_space<smem>>) -> (i32, i32) {
    %c0_i32 = arith.constant 0 : i32
    %c0_i32_0 = arith.constant 0 : i32
    %c0_i32_1 = arith.constant 0 : i32
    return %c0_i32, %c0_i32_0 : i32, i32
  }
  func.func @transform_1(%arg0: i32, %arg1: memref<8x16xi32, #tpu.memory_space<smem>>) -> (i32, i32) {
    %c0_i32 = arith.constant 0 : i32
    %c0_i32_0 = arith.constant 0 : i32
    %c0_i32_1 = arith.constant 0 : i32
    return %c0_i32, %c0_i32_0 : i32, i32
  }
  func.func @transform_2(%arg0: i32, %arg1: memref<8x16xi32, #tpu.memory_space<smem>>) -> (i32, i32) {
    %c0_i32 = arith.constant 0 : i32
    %c0_i32_0 = arith.constant 0 : i32
    %c0_i32_1 = arith.constant 0 : i32
    return %c0_i32, %c0_i32_0 : i32, i32
  }
  func.func @transform_3(%arg0: i32, %arg1: memref<8x16xi32, #tpu.memory_space<smem>>) -> (i32, i32) {
    %c0_i32 = arith.constant 0 : i32
    %c0_i32_0 = arith.constant 0 : i32
    %c0_i32_1 = arith.constant 0 : i32
    return %c0_i32, %c0_i32_0 : i32, i32
  }
  func.func @transform_4(%arg0: i32, %arg1: memref<8x16xi32, #tpu.memory_space<smem>>) -> (i32, i32) {
    %c0_i32 = arith.constant 0 : i32
    %c0_i32_0 = arith.constant 0 : i32
    %c0_i32_1 = arith.constant 0 : i32
    return %c0_i32, %c0_i32_0 : i32, i32
  }
  func.func @transform_5(%arg0: i32, %arg1: memref<8x16xi32, #tpu.memory_space<smem>>) -> (i32, i32) {
    %c0_i32 = arith.constant 0 : i32
    %c0_i32_0 = arith.constant 0 : i32
    return %arg0, %c0_i32 : i32, i32
  }
  func.func @transform_6(%arg0: i32, %arg1: memref<8x16xi32, #tpu.memory_space<smem>>) -> (i32, i32) {
    %c0_i32 = arith.constant 0 : i32
    %c0_i32_0 = arith.constant 0 : i32
    return %arg0, %c0_i32 : i32, i32
  }
}

module attributes {stable_mosaic.version = 11 : i64} {
  func.func @fasttext_kernel(%arg0: i32, %arg1: memref<8x16xi32, #tpu.memory_space<smem>>, %arg2: memref<56x128xf32, #tpu.memory_space<vmem>>, %arg3: memref<128x128xbf16, #tpu.memory_space<vmem>>, %arg4: memref<1x128xf32, #tpu.memory_space<vmem>>, %arg5: memref<128x128xbf16, #tpu.memory_space<vmem>>, %arg6: memref<1x128xf32, #tpu.memory_space<vmem>>, %arg7: memref<8x128xf32, #tpu.memory_space<vmem>>, %arg8: memref<8x128xf32, #tpu.memory_space<vmem>>, %arg9: memref<8x128xf32, #tpu.memory_space<vmem>>) attributes {dimension_semantics = [#tpu.dimension_semantics<parallel>], iteration_bounds = array<i64: 1>, scalar_prefetch = 1 : i64, scratch_operands = 1 : i64, tpu.core_type = #tpu.core_type<tc>, window_params = [{pipeline_mode = #tpu.pipeline_mode<synchronous>, transform_indices = @transform_0, window_bounds = array<i64: 56, 128>}, {pipeline_mode = #tpu.pipeline_mode<synchronous>, transform_indices = @transform_1, window_bounds = array<i64: 128, 128>}, {pipeline_mode = #tpu.pipeline_mode<synchronous>, transform_indices = @transform_2, window_bounds = array<i64: 1, 128>}, {pipeline_mode = #tpu.pipeline_mode<synchronous>, transform_indices = @transform_3, window_bounds = array<i64: 128, 128>}, {pipeline_mode = #tpu.pipeline_mode<synchronous>, transform_indices = @transform_4, window_bounds = array<i64: 1, 128>}, {transform_indices = @transform_5, window_bounds = array<i64: 8, 128>}, {transform_indices = @transform_6, window_bounds = array<i64: 8, 128>}]} {
    %c8_i32 = arith.constant 8 : i32
    %0 = arith.muli %arg0, %c8_i32 : i32
    %c0_i32 = arith.constant 0 : i32
    %c8_i32_0 = arith.constant 8 : i32
    %1 = arith.addi %c0_i32, %c8_i32_0 : i32
    %c1_i32 = arith.constant 1 : i32
    scf.for %arg10 = %c0_i32 to %1 step %c1_i32  : i32 {
      %33 = arith.addi %0, %arg10 : i32
      %cst_20 = arith.constant 0.000000e+00 : f32
      %34 = vector.broadcast %cst_20 : f32 to vector<1x128xf32>
      %c0_i32_21 = arith.constant 0 : i32
      %35 = arith.index_cast %33 : i32 to index
      %36 = arith.index_cast %c0_i32_21 : i32 to index
      %37 = memref.load %arg1[%35, %36] : memref<8x16xi32, #tpu.memory_space<smem>>
      %38 = arith.index_cast %37 : i32 to index
      %c0_22 = arith.constant 0 : index
      %39 = vector.load %arg2[%38, %c0_22] : memref<56x128xf32, #tpu.memory_space<vmem>>, vector<1x128xf32>
      %40 = arith.addf %34, %39 : vector<1x128xf32>
      %c1_i32_23 = arith.constant 1 : i32
      %41 = arith.index_cast %33 : i32 to index
      %42 = arith.index_cast %c1_i32_23 : i32 to index
      %43 = memref.load %arg1[%41, %42] : memref<8x16xi32, #tpu.memory_space<smem>>
      %44 = arith.index_cast %43 : i32 to index
      %c0_24 = arith.constant 0 : index
      %45 = vector.load %arg2[%44, %c0_24] : memref<56x128xf32, #tpu.memory_space<vmem>>, vector<1x128xf32>
      %46 = arith.addf %40, %45 : vector<1x128xf32>
      %c2_i32 = arith.constant 2 : i32
      %47 = arith.index_cast %33 : i32 to index
      %48 = arith.index_cast %c2_i32 : i32 to index
      %49 = memref.load %arg1[%47, %48] : memref<8x16xi32, #tpu.memory_space<smem>>
      %50 = arith.index_cast %49 : i32 to index
      %c0_25 = arith.constant 0 : index
      %51 = vector.load %arg2[%50, %c0_25] : memref<56x128xf32, #tpu.memory_space<vmem>>, vector<1x128xf32>
      %52 = arith.addf %46, %51 : vector<1x128xf32>
      %c3_i32 = arith.constant 3 : i32
      %53 = arith.index_cast %33 : i32 to index
      %54 = arith.index_cast %c3_i32 : i32 to index
      %55 = memref.load %arg1[%53, %54] : memref<8x16xi32, #tpu.memory_space<smem>>
      %56 = arith.index_cast %55 : i32 to index
      %c0_26 = arith.constant 0 : index
      %57 = vector.load %arg2[%56, %c0_26] : memref<56x128xf32, #tpu.memory_space<vmem>>, vector<1x128xf32>
      %58 = arith.addf %52, %57 : vector<1x128xf32>
      %c4_i32 = arith.constant 4 : i32
      %59 = arith.index_cast %33 : i32 to index
      %60 = arith.index_cast %c4_i32 : i32 to index
      %61 = memref.load %arg1[%59, %60] : memref<8x16xi32, #tpu.memory_space<smem>>
      %62 = arith.index_cast %61 : i32 to index
      %c0_27 = arith.constant 0 : index
      %63 = vector.load %arg2[%62, %c0_27] : memref<56x128xf32, #tpu.memory_space<vmem>>, vector<1x128xf32>
      %64 = arith.addf %58, %63 : vector<1x128xf32>
      %c5_i32 = arith.constant 5 : i32
      %65 = arith.index_cast %33 : i32 to index
      %66 = arith.index_cast %c5_i32 : i32 to index
      %67 = memref.load %arg1[%65, %66] : memref<8x16xi32, #tpu.memory_space<smem>>
      %68 = arith.index_cast %67 : i32 to index
      %c0_28 = arith.constant 0 : index
      %69 = vector.load %arg2[%68, %c0_28] : memref<56x128xf32, #tpu.memory_space<vmem>>, vector<1x128xf32>
      %70 = arith.addf %64, %69 : vector<1x128xf32>
      %c6_i32 = arith.constant 6 : i32
      %71 = arith.index_cast %33 : i32 to index
      %72 = arith.index_cast %c6_i32 : i32 to index
      %73 = memref.load %arg1[%71, %72] : memref<8x16xi32, #tpu.memory_space<smem>>
      %74 = arith.index_cast %73 : i32 to index
      %c0_29 = arith.constant 0 : index
      %75 = vector.load %arg2[%74, %c0_29] : memref<56x128xf32, #tpu.memory_space<vmem>>, vector<1x128xf32>
      %76 = arith.addf %70, %75 : vector<1x128xf32>
      %c7_i32 = arith.constant 7 : i32
      %77 = arith.index_cast %33 : i32 to index
      %78 = arith.index_cast %c7_i32 : i32 to index
      %79 = memref.load %arg1[%77, %78] : memref<8x16xi32, #tpu.memory_space<smem>>
      %80 = arith.index_cast %79 : i32 to index
      %c0_30 = arith.constant 0 : index
      %81 = vector.load %arg2[%80, %c0_30] : memref<56x128xf32, #tpu.memory_space<vmem>>, vector<1x128xf32>
      %82 = arith.addf %76, %81 : vector<1x128xf32>
      %c8_i32_31 = arith.constant 8 : i32
      %83 = arith.index_cast %33 : i32 to index
      %84 = arith.index_cast %c8_i32_31 : i32 to index
      %85 = memref.load %arg1[%83, %84] : memref<8x16xi32, #tpu.memory_space<smem>>
      %86 = arith.index_cast %85 : i32 to index
      %c0_32 = arith.constant 0 : index
      %87 = vector.load %arg2[%86, %c0_32] : memref<56x128xf32, #tpu.memory_space<vmem>>, vector<1x128xf32>
      %88 = arith.addf %82, %87 : vector<1x128xf32>
      %c9_i32 = arith.constant 9 : i32
      %89 = arith.index_cast %33 : i32 to index
      %90 = arith.index_cast %c9_i32 : i32 to index
      %91 = memref.load %arg1[%89, %90] : memref<8x16xi32, #tpu.memory_space<smem>>
      %92 = arith.index_cast %91 : i32 to index
      %c0_33 = arith.constant 0 : index
      %93 = vector.load %arg2[%92, %c0_33] : memref<56x128xf32, #tpu.memory_space<vmem>>, vector<1x128xf32>
      %94 = arith.addf %88, %93 : vector<1x128xf32>
      %c10_i32 = arith.constant 10 : i32
      %95 = arith.index_cast %33 : i32 to index
      %96 = arith.index_cast %c10_i32 : i32 to index
      %97 = memref.load %arg1[%95, %96] : memref<8x16xi32, #tpu.memory_space<smem>>
      %98 = arith.index_cast %97 : i32 to index
      %c0_34 = arith.constant 0 : index
      %99 = vector.load %arg2[%98, %c0_34] : memref<56x128xf32, #tpu.memory_space<vmem>>, vector<1x128xf32>
      %100 = arith.addf %94, %99 : vector<1x128xf32>
      %c11_i32 = arith.constant 11 : i32
      %101 = arith.index_cast %33 : i32 to index
      %102 = arith.index_cast %c11_i32 : i32 to index
      %103 = memref.load %arg1[%101, %102] : memref<8x16xi32, #tpu.memory_space<smem>>
      %104 = arith.index_cast %103 : i32 to index
      %c0_35 = arith.constant 0 : index
      %105 = vector.load %arg2[%104, %c0_35] : memref<56x128xf32, #tpu.memory_space<vmem>>, vector<1x128xf32>
      %106 = arith.addf %100, %105 : vector<1x128xf32>
      %c12_i32 = arith.constant 12 : i32
      %107 = arith.index_cast %33 : i32 to index
      %108 = arith.index_cast %c12_i32 : i32 to index
      %109 = memref.load %arg1[%107, %108] : memref<8x16xi32, #tpu.memory_space<smem>>
      %110 = arith.index_cast %109 : i32 to index
      %c0_36 = arith.constant 0 : index
      %111 = vector.load %arg2[%110, %c0_36] : memref<56x128xf32, #tpu.memory_space<vmem>>, vector<1x128xf32>
      %112 = arith.addf %106, %111 : vector<1x128xf32>
      %c13_i32 = arith.constant 13 : i32
      %113 = arith.index_cast %33 : i32 to index
      %114 = arith.index_cast %c13_i32 : i32 to index
      %115 = memref.load %arg1[%113, %114] : memref<8x16xi32, #tpu.memory_space<smem>>
      %116 = arith.index_cast %115 : i32 to index
      %c0_37 = arith.constant 0 : index
      %117 = vector.load %arg2[%116, %c0_37] : memref<56x128xf32, #tpu.memory_space<vmem>>, vector<1x128xf32>
      %118 = arith.addf %112, %117 : vector<1x128xf32>
      %c14_i32 = arith.constant 14 : i32
      %119 = arith.index_cast %33 : i32 to index
      %120 = arith.index_cast %c14_i32 : i32 to index
      %121 = memref.load %arg1[%119, %120] : memref<8x16xi32, #tpu.memory_space<smem>>
      %122 = arith.index_cast %121 : i32 to index
      %c0_38 = arith.constant 0 : index
      %123 = vector.load %arg2[%122, %c0_38] : memref<56x128xf32, #tpu.memory_space<vmem>>, vector<1x128xf32>
      %124 = arith.addf %118, %123 : vector<1x128xf32>
      %c15_i32 = arith.constant 15 : i32
      %125 = arith.index_cast %33 : i32 to index
      %126 = arith.index_cast %c15_i32 : i32 to index
      %127 = memref.load %arg1[%125, %126] : memref<8x16xi32, #tpu.memory_space<smem>>
      %128 = arith.index_cast %127 : i32 to index
      %c0_39 = arith.constant 0 : index
      %129 = vector.load %arg2[%128, %c0_39] : memref<56x128xf32, #tpu.memory_space<vmem>>, vector<1x128xf32>
      %130 = arith.addf %124, %129 : vector<1x128xf32>
      %c16_i32 = arith.constant 16 : i32
      %cst_40 = arith.constant 6.250000e-02 : f32
      %131 = vector.broadcast %cst_40 : f32 to vector<1x128xf32>
      %132 = arith.mulf %130, %131 : vector<1x128xf32>
      %133 = arith.index_cast %arg10 : i32 to index
      %c0_41 = arith.constant 0 : index
      %134 = vector.load %arg9[%133, %c0_41] : memref<8x128xf32, #tpu.memory_space<vmem>>, vector<1x128xf32>
      tpu.vector_store %arg9[%133, %c0_41], %132 {strides = array<i32>} : memref<8x128xf32, #tpu.memory_space<vmem>>, vector<1x128xf32>,
    }
    %c8_i32_1 = arith.constant 8 : i32
    %c0 = arith.constant 0 : index
    %c0_2 = arith.constant 0 : index
    %2 = vector.load %arg9[%c0, %c0_2] : memref<8x128xf32, #tpu.memory_space<vmem>>, vector<8x128xf32>
    %3 = arith.truncf %2 : vector<8x128xf32> to vector<8x128xbf16>
    %c0_3 = arith.constant 0 : index
    %c0_4 = arith.constant 0 : index
    %4 = vector.load %arg3[%c0_3, %c0_4] : memref<128x128xbf16, #tpu.memory_space<vmem>>, vector<128x128xbf16>
    %cst = arith.constant dense<0.000000e+00> : vector<8x128xf32>
    %5 = tpu.matmul %3, %4, %cst {dimension_numbers = #tpu.dot_dimension_numbers<[1], [0], [0], [1], [0, 0, 1, 1], [], []>} : vector<8x128xbf16>, vector<128x128xbf16>, vector<8x128xf32> -> vector<8x128xf32>
    %c0_5 = arith.constant 0 : index
    %c0_6 = arith.constant 0 : index
    %6 = vector.load %arg4[%c0_5, %c0_6] : memref<1x128xf32, #tpu.memory_space<vmem>>, vector<1x128xf32>
    %7 = vector.broadcast %6 : vector<1x128xf32> to vector<8x128xf32>
    %8 = arith.addf %5, %7 : vector<8x128xf32>
    %cst_7 = arith.constant 0.000000e+00 : f32
    %9 = vector.broadcast %cst_7 : f32 to vector<8x128xf32>
    %10 = arith.maximumf %8, %9 : vector<8x128xf32>
    %11 = arith.truncf %10 : vector<8x128xf32> to vector<8x128xbf16>
    %c0_8 = arith.constant 0 : index
    %c0_9 = arith.constant 0 : index
    %12 = vector.load %arg5[%c0_8, %c0_9] : memref<128x128xbf16, #tpu.memory_space<vmem>>, vector<128x128xbf16>
    %cst_10 = arith.constant dense<0.000000e+00> : vector<8x128xf32>
    %13 = tpu.matmul %11, %12, %cst_10 {dimension_numbers = #tpu.dot_dimension_numbers<[1], [0], [0], [1], [0, 0, 1, 1], [], []>} : vector<8x128xbf16>, vector<128x128xbf16>, vector<8x128xf32> -> vector<8x128xf32>
    %c0_11 = arith.constant 0 : index
    %c0_12 = arith.constant 0 : index
    %14 = vector.load %arg6[%c0_11, %c0_12] : memref<1x128xf32, #tpu.memory_space<vmem>>, vector<1x128xf32>
    %15 = vector.broadcast %14 : vector<1x128xf32> to vector<8x128xf32>
    %16 = arith.addf %13, %15 : vector<8x128xf32>
    %cst_13 = arith.constant dense<0xFF800000> : vector<8xf32>
    %17 = vector.multi_reduction <maximumf>, %16, %cst_13 [1] : vector<8x128xf32> to vector<8xf32>
    %18 = vector.shape_cast %17 : vector<8xf32> to vector<8x1xf32>
    %19 = vector.broadcast %18 : vector<8x1xf32> to vector<8x128xf32>
    %20 = arith.subf %16, %19 : vector<8x128xf32>
    %21 = math.exp %20 : vector<8x128xf32>
    %cst_14 = arith.constant dense<0.000000e+00> : vector<8xf32>
    %22 = vector.multi_reduction <add>, %21, %cst_14 [1] : vector<8x128xf32> to vector<8xf32>
    %23 = vector.shape_cast %22 : vector<8xf32> to vector<8x1xf32>
    %24 = tpu.reciprocal %23 {approx = true} : vector<8x1xf32> -> vector<8x1xf32>
    %25 = arith.mulf %23, %24 : vector<8x1xf32>
    %cst_15 = arith.constant 2.000000e+00 : f32
    %26 = vector.broadcast %cst_15 : f32 to vector<8x1xf32>
    %27 = arith.subf %26, %25 : vector<8x1xf32>
    %28 = arith.mulf %24, %27 : vector<8x1xf32>
    %29 = vector.broadcast %28 : vector<8x1xf32> to vector<8x128xf32>
    %30 = arith.mulf %21, %29 : vector<8x128xf32>
    %c0_16 = arith.constant 0 : index
    %c0_17 = arith.constant 0 : index
    %31 = vector.load %arg7[%c0_16, %c0_17] : memref<8x128xf32, #tpu.memory_space<vmem>>, vector<8x128xf32>
    tpu.vector_store %arg7[%c0_16, %c0_17], %30 {strides = array<i32>} : memref<8x128xf32, #tpu.memory_space<vmem>>, vector<8x128xf32>,
    %c0_18 = arith.constant 0 : index
    %c0_19 = arith.constant 0 : index
    %32 = vector.load %arg8[%c0_18, %c0_19] : memref<8x128xf32, #tpu.memory_space<vmem>>, vector<8x128xf32>
    tpu.vector_store %arg8[%c0_18, %c0_19], %10 {strides = array<i32>} : memref<8x128xf32, #tpu.memory_space<vmem>>, vector<8x128xf32>,
    return
  }
  func.func @transform_0(%arg0: i32, %arg1: memref<8x16xi32, #tpu.memory_space<smem>>) -> (i32, i32) {
    %c0_i32 = arith.constant 0 : i32
    %c0_i32_0 = arith.constant 0 : i32
    %c0_i32_1 = arith.constant 0 : i32
    return %c0_i32, %c0_i32_0 : i32, i32
  }
  func.func @transform_1(%arg0: i32, %arg1: memref<8x16xi32, #tpu.memory_space<smem>>) -> (i32, i32) {
    %c0_i32 = arith.constant 0 : i32
    %c0_i32_0 = arith.constant 0 : i32
    %c0_i32_1 = arith.constant 0 : i32
    return %c0_i32, %c0_i32_0 : i32, i32
  }
  func.func @transform_2(%arg0: i32, %arg1: memref<8x16xi32, #tpu.memory_space<smem>>) -> (i32, i32) {
    %c0_i32 = arith.constant 0 : i32
    %c0_i32_0 = arith.constant 0 : i32
    %c0_i32_1 = arith.constant 0 : i32
    return %c0_i32, %c0_i32_0 : i32, i32
  }
  func.func @transform_3(%arg0: i32, %arg1: memref<8x16xi32, #tpu.memory_space<smem>>) -> (i32, i32) {
    %c0_i32 = arith.constant 0 : i32
    %c0_i32_0 = arith.constant 0 : i32
    %c0_i32_1 = arith.constant 0 : i32
    return %c0_i32, %c0_i32_0 : i32, i32
  }
  func.func @transform_4(%arg0: i32, %arg1: memref<8x16xi32, #tpu.memory_space<smem>>) -> (i32, i32) {
    %c0_i32 = arith.constant 0 : i32
    %c0_i32_0 = arith.constant 0 : i32
    %c0_i32_1 = arith.constant 0 : i32
    return %c0_i32, %c0_i32_0 : i32, i32
  }
  func.func @transform_5(%arg0: i32, %arg1: memref<8x16xi32, #tpu.memory_space<smem>>) -> (i32, i32) {
    %c0_i32 = arith.constant 0 : i32
    %c0_i32_0 = arith.constant 0 : i32
    return %arg0, %c0_i32 : i32, i32
  }
  func.func @transform_6(%arg0: i32, %arg1: memref<8x16xi32, #tpu.memory_space<smem>>) -> (i32, i32) {
    %c0_i32 = arith.constant 0 : i32
    %c0_i32_0 = arith.constant 0 : i32
    return %arg0, %c0_i32 : i32, i32
  }
}

</mosaic_0001>

<llo_original>
// kernel: tpu_custom_call.1
$region0: #{tpu_custom_call.1}
  #allocation0 [shape = 'u32[]', space=smem, size = 0x4, offset = 0x4, fixed_abs, tag = 'smem constant byte address 0x4 - core index']
  #allocation1 [shape = 'u32[144,128]{1,0:T(1,128)}', space=vmem, size = 0x12000, scoped, tag = 'internal scratch']
  #allocation2 [shape = 'f32[8,128]{1,0:T(8,128)}', space=vmem, size = 0x1000, scoped, tag = 'scratch operand']
  #allocation3 [shape = 's32[1]{0}', space=sflag, size = 0x4, scoped, tag = 'scoped memory for tpu_custom_call.1']
  #allocation4 [shape = 'u8[4096]{0}', space=smem, size = 0x1000, scoped, tag = 'prefetched SMEM operand 0']
  %s0 = inlined_call_operand.hbm [shape: s32[8,16], index: 0, kind: input, shape index: {}]
  %s1 = inlined_call_operand.hbm [shape: f32[56,128], index: 1, kind: input, shape index: {}]
  %s2 = inlined_call_operand.hbm [shape: bf16[128,128], index: 2, kind: input, shape index: {}]
  %s3 = inlined_call_operand.vmem [shape: f32[1,128], index: 3, kind: input, shape index: {}]
  %s4 = inlined_call_operand.hbm [shape: bf16[128,128], index: 4, kind: input, shape index: {}]
  %s5 = inlined_call_operand.vmem [shape: f32[1,128], index: 5, kind: input, shape index: {}]
  %s6 = inlined_call_operand.hbm [shape: f32[8,128], index: 6, kind: output, shape index: {0}]
  %s7 = inlined_call_operand.hbm [shape: f32[8,128], index: 7, kind: output, shape index: {1}]
  %8 = xla_tuple %s6, %s7
  %s9 = sld [smem:[#allocation0]]
  $region57: #{tpu_custom_call.1} parent=0
    _
  %s11 = ssub.s32 1, %s9
  %s12 = scalar_select 0, %s11, %s9
  %14 = dma.hbm_to_smem %s0, 128, [#allocation4], [#allocation3]
  %15 = dma.done [#allocation3], 128
  %16 = sfence
  $region1: #{tpu_custom_call.1} parent=0
    #allocation5 [shape = 'u8[28672]{0}', space=vmem, size = 0x7000, scoped, tag = 'input window, operand 1, single buffered']
    #allocation6 [shape = 's32[1]{0}', space=sflag, size = 0x4, scoped, tag = 'scoped memory for tpu_custom_call.1']
    #allocation7 [shape = 's32[1]{0}', space=sflag, size = 0x4, scoped, tag = 'scoped memory for tpu_custom_call.1']
    #allocation8 [shape = 'u8[32768]{0}', space=vmem, size = 0x8000, scoped, tag = 'input window, operand 2, single buffered']
    #allocation9 [shape = 's32[1]{0}', space=sflag, size = 0x4, scoped, tag = 'scoped memory for tpu_custom_call.1']
    #allocation10 [shape = 'u8[32768]{0}', space=vmem, size = 0x8000, scoped, tag = 'input window, operand 4, single buffered']
    #allocation11 [shape = 'u8[4096]{0}', space=vmem, size = 0x1000, scoped, tag = 'output window, operand 0, single buffered']
    #allocation12 [shape = 'u8[4096]{0}', space=vmem, size = 0x1000, scoped, tag = 'output window, operand 1, single buffered']
    #allocation13 [shape = 's32[1]{0}', space=sflag, size = 0x4, scoped, tag = 'scoped memory for tpu_custom_call.1']
    %17 = vsyncpa [#allocation6], 0
    %18 = vsyncpa [#allocation9], 0
    %19 = vsyncpa [#allocation7], 0
    %20 = vsyncpa [#allocation13], 0
    // Predicated region
    $region2: #{tpu_custom_call.1} parent=1 // pred_check
      _
    $region3: #{tpu_custom_call.1} parent=1 // pred_check_branch
      %22 = sbr.rel (0) target = $region5
    $region4: #{tpu_custom_call.1} parent=1 // pred_region
      %s24 = ssub.s32 896, 896
      %25 = vsyncadd [#allocation6], %s24
      %s26 = sshll.u32 [#allocation5], 4
      %s27 = int_to_ptr.vmem [resolvable:$true] %s26
      %32 = dma.hbm_to_vmem [thread:$0]  %s1, 896, %s27, [#allocation6], 128, 128, 8
    $region5: #{tpu_custom_call.1} parent=1 // pred_fallthru
      _
    // Predicated region
    $region6: #{tpu_custom_call.1} parent=1 // pred_check
      _
    $region7: #{tpu_custom_call.1} parent=1 // pred_check_branch
      %34 = sbr.rel (0) target = $region9
    $region8: #{tpu_custom_call.1} parent=1 // pred_region
      %s36 = ssub.s32 1024, 1024
      %37 = vsyncadd [#allocation9], %s36
      %s38 = sshll.u32 [#allocation8], 4
      %s39 = int_to_ptr.vmem [resolvable:$true] %s38
      %44 = dma.hbm_to_vmem [thread:$0]  %s2, 1024, %s39, [#allocation9], 64, 64, 4
    $region9: #{tpu_custom_call.1} parent=1 // pred_fallthru
      _
    // Predicated region
    $region10: #{tpu_custom_call.1} parent=1 // pred_check
      _
    $region11: #{tpu_custom_call.1} parent=1 // pred_check_branch
      %46 = sbr.rel (0) target = $region13
    $region12: #{tpu_custom_call.1} parent=1 // pred_region
      _
    $region13: #{tpu_custom_call.1} parent=1 // pred_fallthru
      _
    // Predicated region
    $region14: #{tpu_custom_call.1} parent=1 // pred_check
      _
    $region15: #{tpu_custom_call.1} parent=1 // pred_check_branch
      %48 = sbr.rel (0) target = $region17
    $region16: #{tpu_custom_call.1} parent=1 // pred_region
      %s50 = ssub.s32 1024, 1024
      %51 = vsyncadd [#allocation9], %s50
      %s52 = sshll.u32 [#allocation10], 4
      %s53 = int_to_ptr.vmem [resolvable:$true] %s52
      %58 = dma.hbm_to_vmem [thread:$0]  %s4, 1024, %s53, [#allocation9], 64, 64, 4
    $region17: #{tpu_custom_call.1} parent=1 // pred_fallthru
      _
    // Predicated region
    $region18: #{tpu_custom_call.1} parent=1 // pred_check
      _
    $region19: #{tpu_custom_call.1} parent=1 // pred_check_branch
      %60 = sbr.rel (0) target = $region21
    $region20: #{tpu_custom_call.1} parent=1 // pred_region
      _
    $region21: #{tpu_custom_call.1} parent=1 // pred_fallthru
      _
    // Predicated region
    $region22: #{tpu_custom_call.1} parent=1 // pred_check
      _
    $region23: #{tpu_custom_call.1} parent=1 // pred_check_branch
      %62 = sbr.rel (0) target = $region25
    $region24: #{tpu_custom_call.1} parent=1 // pred_region
      %63 = dma.done [#allocation6], 896
    $region25: #{tpu_custom_call.1} parent=1 // pred_fallthru
      _
    // Predicated region
    $region26: #{tpu_custom_call.1} parent=1 // pred_check
      _
    $region27: #{tpu_custom_call.1} parent=1 // pred_check_branch
      %65 = sbr.rel (0) target = $region29
    $region28: #{tpu_custom_call.1} parent=1 // pred_region
      %66 = dma.done [#allocation9], 1024
    $region29: #{tpu_custom_call.1} parent=1 // pred_fallthru
      _
    // Predicated region
    $region30: #{tpu_custom_call.1} parent=1 // pred_check
      _
    $region31: #{tpu_custom_call.1} parent=1 // pred_check_branch
      %68 = sbr.rel (0) target = $region33
    $region32: #{tpu_custom_call.1} parent=1 // pred_region
      %69 = dma.done [#allocation9], 1024
    $region33: #{tpu_custom_call.1} parent=1 // pred_fallthru
      _
    %s71 = smul.u32 0, 8
    loop: start=0, step=1, limit=8
    $region34: #{tpu_custom_call.1} parent=1 // loop_pre_header
      _
    $region35: #{tpu_custom_call.1} parent=1 // loop_header
      %s73 = sphi 0, %s77
      %p74 = scmp.ge.s32.totalorder %s73, 8
    $region36: #{tpu_custom_call.1} parent=1 // loop_header_branch
      %76 = sbr.rel (%p74) target = $region40
    $region37: #{tpu_custom_call.1} parent=1 // loop_body
      %s78 = sadd.s32 %s71, %s73
      %s79 = smul.u32 %s78, 128
      %s80 = sld [smem:[#allocation4 + %s79]]
      %s81 = scalar_lea.vmem [#allocation5], %s80
      %v82 = vld [vmem:[%s81] sm:$0x1]
      %v83 = vadd.f32 %v82, 0.0
      %s84 = sadd.s32 %s79, 1
      %s85 = sld [smem:[#allocation4 + %s84]]
      %s86 = scalar_lea.vmem [#allocation5], %s85
      %v87 = vld [vmem:[%s86] sm:$0x1]
      %v88 = vadd.f32 %v83, %v87
      %s89 = sadd.s32 %s79, 2
      %s90 = sld [smem:[#allocation4 + %s89]]
      %s91 = scalar_lea.vmem [#allocation5], %s90
      %v92 = vld [vmem:[%s91] sm:$0x1]
      %v93 = vadd.f32 %v88, %v92
      %s94 = sadd.s32 %s79, 3
      %s95 = sld [smem:[#allocation4 + %s94]]
      %s96 = scalar_lea.vmem [#allocation5], %s95
      %v97 = vld [vmem:[%s96] sm:$0x1]
      %v98 = vadd.f32 %v93, %v97
      %s99 = sadd.s32 %s79, 4
      %s100 = sld [smem:[#allocation4 + %s99]]
      %s101 = scalar_lea.vmem [#allocation5], %s100
      %v102 = vld [vmem:[%s101] sm:$0x1]
      %v103 = vadd.f32 %v98, %v102
      %s104 = sadd.s32 %s79, 5
      %s105 = sld [smem:[#allocation4 + %s104]]
      %s106 = scalar_lea.vmem [#allocation5], %s105
      %v107 = vld [vmem:[%s106] sm:$0x1]
      %v108 = vadd.f32 %v103, %v107
      %s109 = sadd.s32 %s79, 6
      %s110 = sld [smem:[#allocation4 + %s109]]
      %s111 = scalar_lea.vmem [#allocation5], %s110
      %v112 = vld [vmem:[%s111] sm:$0x1]
      %v113 = vadd.f32 %v108, %v112
      %s114 = sadd.s32 %s79, 7
      %s115 = sld [smem:[#allocation4 + %s114]]
      %s116 = scalar_lea.vmem [#allocation5], %s115
      %v117 = vld [vmem:[%s116] sm:$0x1]
      %v118 = vadd.f32 %v113, %v117
      %s119 = sadd.s32 %s79, 8
      %s120 = sld [smem:[#allocation4 + %s119]]
      %s121 = scalar_lea.vmem [#allocation5], %s120
      %v122 = vld [vmem:[%s121] sm:$0x1]
      %v123 = vadd.f32 %v118, %v122
      %s124 = sadd.s32 %s79, 9
      %s125 = sld [smem:[#allocation4 + %s124]]
      %s126 = scalar_lea.vmem [#allocation5], %s125
      %v127 = vld [vmem:[%s126] sm:$0x1]
      %v128 = vadd.f32 %v123, %v127
      %s129 = sadd.s32 %s79, 10
      %s130 = sld [smem:[#allocation4 + %s129]]
      %s131 = scalar_lea.vmem [#allocation5], %s130
      %v132 = vld [vmem:[%s131] sm:$0x1]
      %v133 = vadd.f32 %v128, %v132
      %s134 = sadd.s32 %s79, 11
      %s135 = sld [smem:[#allocation4 + %s134]]
      %s136 = scalar_lea.vmem [#allocation5], %s135
      %v137 = vld [vmem:[%s136] sm:$0x1]
      %v138 = vadd.f32 %v133, %v137
      %s139 = sadd.s32 %s79, 12
      %s140 = sld [smem:[#allocation4 + %s139]]
      %s141 = scalar_lea.vmem [#allocation5], %s140
      %v142 = vld [vmem:[%s141] sm:$0x1]
      %v143 = vadd.f32 %v138, %v142
      %s144 = sadd.s32 %s79, 13
      %s145 = sld [smem:[#allocation4 + %s144]]
      %s146 = scalar_lea.vmem [#allocation5], %s145
      %v147 = vld [vmem:[%s146] sm:$0x1]
      %v148 = vadd.f32 %v143, %v147
      %s149 = sadd.s32 %s79, 14
      %s150 = sld [smem:[#allocation4 + %s149]]
      %s151 = scalar_lea.vmem [#allocation5], %s150
      %v152 = vld [vmem:[%s151] sm:$0x1]
      %v153 = vadd.f32 %v148, %v152
      %s154 = sadd.s32 %s79, 15
      %s155 = sld [smem:[#allocation4 + %s154]]
      %s156 = scalar_lea.vmem [#allocation5], %s155
      %v157 = vld [vmem:[%s156] sm:$0x1]
      %v158 = vadd.f32 %v153, %v157
      %v159 = vmul.f32 %v158, 0.0625
      %s160 = scalar_lea.vmem [#allocation2], %s73
      %161 = vst [vmem:[%s160] sm:$0x1] %v159
    $region38: #{tpu_custom_call.1} parent=1 // loop_footer
      %s77 = sadd.s32 1, %s73
    $region39: #{tpu_custom_call.1} parent=1 // loop_footer_branch
      %72 = sbr.rel target = $region35
    $region40: #{tpu_custom_call.1} parent=1 // loop_exit
      _
    %v162 = vld [vmem:[#allocation2] sm:$0xff]
    %v163 = vpack.c.bf16 %v162, %v162
    %v164 = vld [vmem:[#allocation8] sm:$0xf]
    %v165 = vld [vmem:[#allocation8 + $0x4] sm:$0xf]
    %v166 = vld [vmem:[#allocation8 + $0x8] sm:$0xf]
    %v167 = vld [vmem:[#allocation8 + $0xc] sm:$0xf]
    %v168 = vld [vmem:[#allocation8 + $0x10] sm:$0xf]
    %v169 = vld [vmem:[#allocation8 + $0x14] sm:$0xf]
    %v170 = vld [vmem:[#allocation8 + $0x18] sm:$0xf]
    %v171 = vld [vmem:[#allocation8 + $0x1c] sm:$0xf]
    %v172 = vld [vmem:[#allocation8 + $0x20] sm:$0xf]
    %v173 = vld [vmem:[#allocation8 + $0x24] sm:$0xf]
    %v174 = vld [vmem:[#allocation8 + $0x28] sm:$0xf]
    %v175 = vld [vmem:[#allocation8 + $0x2c] sm:$0xf]
    %v176 = vld [vmem:[#allocation8 + $0x30] sm:$0xf]
    %v177 = vld [vmem:[#allocation8 + $0x34] sm:$0xf]
    %v178 = vld [vmem:[#allocation8 + $0x38] sm:$0xf]
    %v179 = vld [vmem:[#allocation8 + $0x3c] sm:$0xf]
    %v180 = vld [vmem:[%s3] sm:$0x1]
    %v182 = vlaneseq
    %v183 = vshrl.u32 %v182, 7
    %v184 = vsub.s32 0, %v183
    %v185 = vrot.slane %v180, %v184
    %v203 = vunpack.c.l.b16 %v164
    %v204 = vunpack.c.l.b16 %v165
    %v205 = vunpack.c.l.b16 %v166
    %v206 = vunpack.c.l.b16 %v167
    %v207 = vunpack.c.l.b16 %v168
    %v208 = vunpack.c.l.b16 %v169
    %v209 = vunpack.c.l.b16 %v170
    %v210 = vunpack.c.l.b16 %v171
    %v211 = vunpack.c.l.b16 %v172
    %v212 = vunpack.c.l.b16 %v173
    %v213 = vunpack.c.l.b16 %v174
    %v214 = vunpack.c.l.b16 %v175
    %v215 = vunpack.c.l.b16 %v176
    %v216 = vunpack.c.l.b16 %v177
    %v217 = vunpack.c.l.b16 %v178
    %v218 = vunpack.c.l.b16 %v179
    %v219 = vpack.c.b16 %v204, %v203
    %v220 = vpack.c.b16 %v206, %v205
    %v221 = vpack.c.b16 %v208, %v207
    %v222 = vpack.c.b16 %v210, %v209
    %v223 = vpack.c.b16 %v212, %v211
    %v224 = vpack.c.b16 %v214, %v213
    %v225 = vpack.c.b16 %v216, %v215
    %v226 = vpack.c.b16 %v218, %v217
    %235 = vmatprep.subr.bf16.mxu0 0
    %236 = vmatpush1.bf16.msra.mxu0 %v219
    %237 = vmatprep.subr.bf16.mxu0 0
    %238 = vmatpush1.bf16.msra.mxu0 %v220
    %239 = vmatprep.subr.bf16.mxu0 0
    %240 = vmatpush1.bf16.msra.mxu0 %v221
    %241 = vmatprep.subr.bf16.mxu0 0
    %242 = vmatpush1.bf16.msra.mxu0 %v222
    %243 = vmatprep.subr.bf16.mxu0 0
    %244 = vmatpush1.bf16.msra.mxu0 %v223
    %245 = vmatprep.subr.bf16.mxu0 0
    %246 = vmatpush1.bf16.msra.mxu0 %v224
    %247 = vmatprep.subr.bf16.mxu0 0
    %248 = vmatpush1.bf16.msra.mxu0 %v225
    %249 = vmatprep.subr.bf16.mxu0 0
    %250 = vmatpush1.bf16.msra.mxu0 %v226
    %251 = vmatprep.subr.bf16.mxu0 0
    %252 = vmatpush1.bf16.msra.mxu0 0
    %253 = vmatprep.subr.bf16.mxu0 0
    %254 = vmatpush1.bf16.msra.mxu0 0
    %255 = vmatprep.subr.bf16.mxu0 0
    %256 = vmatpush1.bf16.msra.mxu0 0
    %257 = vmatprep.subr.bf16.mxu0 0
    %258 = vmatpush1.bf16.msra.mxu0 0
    %259 = vmatprep.subr.bf16.mxu0 0
    %260 = vmatpush1.bf16.msra.mxu0 0
    %261 = vmatprep.subr.bf16.mxu0 0
    %262 = vmatpush1.bf16.msra.mxu0 0
    %263 = vmatprep.subr.bf16.mxu0 0
    %264 = vmatpush1.bf16.msra.mxu0 0
    %265 = vmatprep.subr.bf16.mxu0 0
    %266 = vmatpush1.bf16.msra.mxu0 0
    %267 = vmatprep.mubr.bf16.mxu0 0
    %268 = vmatmul.mubr.bf16.gmra.mrb[0].mxu0 %v163
    %v269 = vpop.f32.mrb[0].mxu0
    %v270 = vadd.f32 %v185, %v269
    %v271 = vpop.f32.mrb[0].mxu0
    %v272 = vpop.f32.mrb[0].mxu0
    %v273 = vpop.f32.mrb[0].mxu0
    %274 = vdwg.mxu0
    %v275 = vmax.f32 %v270, 0.0
    %v276 = vpack.c.bf16 %v275, %v275
    %v277 = vld [vmem:[#allocation10] sm:$0xf]
    %v278 = vld [vmem:[#allocation10 + $0x4] sm:$0xf]
    %v279 = vld [vmem:[#allocation10 + $0x8] sm:$0xf]
    %v280 = vld [vmem:[#allocation10 + $0xc] sm:$0xf]
    %v281 = vld [vmem:[#allocation10 + $0x10] sm:$0xf]
    %v282 = vld [vmem:[#allocation10 + $0x14] sm:$0xf]
    %v283 = vld [vmem:[#allocation10 + $0x18] sm:$0xf]
    %v284 = vld [vmem:[#allocation10 + $0x1c] sm:$0xf]
    %v285 = vld [vmem:[#allocation10 + $0x20] sm:$0xf]
    %v286 = vld [vmem:[#allocation10 + $0x24] sm:$0xf]
    %v287 = vld [vmem:[#allocation10 + $0x28] sm:$0xf]
    %v288 = vld [vmem:[#allocation10 + $0x2c] sm:$0xf]
    %v289 = vld [vmem:[#allocation10 + $0x30] sm:$0xf]
    %v290 = vld [vmem:[#allocation10 + $0x34] sm:$0xf]
    %v291 = vld [vmem:[#allocation10 + $0x38] sm:$0xf]
    %v292 = vld [vmem:[#allocation10 + $0x3c] sm:$0xf]
    %v293 = vld [vmem:[%s5] sm:$0x1]
    %v295 = vlaneseq
    %v296 = vshrl.u32 %v295, 7
    %v297 = vsub.s32 0, %v296
    %v298 = vrot.slane %v293, %v297
    %v316 = vunpack.c.l.b16 %v277
    %v317 = vunpack.c.l.b16 %v278
    %v318 = vunpack.c.l.b16 %v279
    %v319 = vunpack.c.l.b16 %v280
    %v320 = vunpack.c.l.b16 %v281
    %v321 = vunpack.c.l.b16 %v282
    %v322 = vunpack.c.l.b16 %v283
    %v323 = vunpack.c.l.b16 %v284
    %v324 = vunpack.c.l.b16 %v285
    %v325 = vunpack.c.l.b16 %v286
    %v326 = vunpack.c.l.b16 %v287
    %v327 = vunpack.c.l.b16 %v288
    %v328 = vunpack.c.l.b16 %v289
    %v329 = vunpack.c.l.b16 %v290
    %v330 = vunpack.c.l.b16 %v291
    %v331 = vunpack.c.l.b16 %v292
    %v332 = vpack.c.b16 %v317, %v316
    %v333 = vpack.c.b16 %v319, %v318
    %v334 = vpack.c.b16 %v321, %v320
    %v335 = vpack.c.b16 %v323, %v322
    %v336 = vpack.c.b16 %v325, %v324
    %v337 = vpack.c.b16 %v327, %v326
    %v338 = vpack.c.b16 %v329, %v328
    %v339 = vpack.c.b16 %v331, %v330
    %348 = vmatprep.subr.bf16.mxu0 0
    %349 = vmatpush1.bf16.msra.mxu0 %v332
    %350 = vmatprep.subr.bf16.mxu0 0
    %351 = vmatpush1.bf16.msra.mxu0 %v333
    %352 = vmatprep.subr.bf16.mxu0 0
    %353 = vmatpush1.bf16.msra.mxu0 %v334
    %354 = vmatprep.subr.bf16.mxu0 0
    %355 = vmatpush1.bf16.msra.mxu0 %v335
    %356 = vmatprep.subr.bf16.mxu0 0
    %357 = vmatpush1.bf16.msra.mxu0 %v336
    %358 = vmatprep.subr.bf16.mxu0 0
    %359 = vmatpush1.bf16.msra.mxu0 %v337
    %360 = vmatprep.subr.bf16.mxu0 0
    %361 = vmatpush1.bf16.msra.mxu0 %v338
    %362 = vmatprep.subr.bf16.mxu0 0
    %363 = vmatpush1.bf16.msra.mxu0 %v339
    %364 = vmatprep.subr.bf16.mxu0 0
    %365 = vmatpush1.bf16.msra.mxu0 0
    %366 = vmatprep.subr.bf16.mxu0 0
    %367 = vmatpush1.bf16.msra.mxu0 0
    %368 = vmatprep.subr.bf16.mxu0 0
    %369 = vmatpush1.bf16.msra.mxu0 0
    %370 = vmatprep.subr.bf16.mxu0 0
    %371 = vmatpush1.bf16.msra.mxu0 0
    %372 = vmatprep.subr.bf16.mxu0 0
    %373 = vmatpush1.bf16.msra.mxu0 0
    %374 = vmatprep.subr.bf16.mxu0 0
    %375 = vmatpush1.bf16.msra.mxu0 0
    %376 = vmatprep.subr.bf16.mxu0 0
    %377 = vmatpush1.bf16.msra.mxu0 0
    %378 = vmatprep.subr.bf16.mxu0 0
    %379 = vmatpush1.bf16.msra.mxu0 0
    %380 = vmatprep.mubr.bf16.mxu0 0
    %381 = vmatmul.mubr.bf16.gmra.mrb[0].mxu0 %v276
    %v382 = vpop.f32.mrb[0].mxu0
    %v383 = vadd.f32 %v298, %v382
    %v384 = vpop.f32.mrb[0].mxu0
    %v385 = vpop.f32.mrb[0].mxu0
    %v386 = vpop.f32.mrb[0].mxu0
    %387 = vdwg.mxu0
    %388 = vmax.xlane.f32.xlu0 %v383
    %v389 = vpop.xlane.xlu0 %388
    %v390 = vsub.f32 %v383, %v389
    %v391 = vmul.f32 %v390, 1.442695
    %v392 = vpow.pop %v391
    %393 = vadd.xlane.f32.xlu0 %v392
    %v394 = vpop.xlane.xlu0 %393
    %v395 = vrcp.pop %v394
    %v396 = vmul.f32 %v394, %v395
    %v397 = vsub.f32 2.0, %v396
    %v398 = vmul.f32 %v395, %v397
    %v399 = vmul.f32 %v392, %v398
    %400 = vst [vmem:[#allocation11] sm:$0xff] %v399
    %401 = vst [vmem:[#allocation12] sm:$0xff] %v275
    // Predicated region
    $region41: #{tpu_custom_call.1} parent=1 // pred_check
      _
    $region42: #{tpu_custom_call.1} parent=1 // pred_check_branch
      %403 = sbr.rel (0) target = $region44
    $region43: #{tpu_custom_call.1} parent=1 // pred_region
      %s405 = ssub.s32 128, 128
      %406 = vsyncadd [#allocation7], %s405
      %s408 = sshll.u32 [#allocation11], 4
      %s409 = int_to_ptr.vmem [resolvable:$true] %s408
      %411 = dma.vmem_to_hbm [thread:$0]  %s409, 128, %s6, [#allocation7]
    $region44: #{tpu_custom_call.1} parent=1 // pred_fallthru
      _
    // Predicated region
    $region45: #{tpu_custom_call.1} parent=1 // pred_check
      _
    $region46: #{tpu_custom_call.1} parent=1 // pred_check_branch
      %413 = sbr.rel (0) target = $region48
    $region47: #{tpu_custom_call.1} parent=1 // pred_region
      %s415 = ssub.s32 128, 128
      %416 = vsyncadd [#allocation13], %s415
      %s418 = sshll.u32 [#allocation12], 4
      %s419 = int_to_ptr.vmem [resolvable:$true] %s418
      %421 = dma.vmem_to_hbm [thread:$0]  %s419, 128, %s7, [#allocation13]
    $region48: #{tpu_custom_call.1} parent=1 // pred_fallthru
      _
    // Predicated region
    $region49: #{tpu_custom_call.1} parent=1 // pred_check
      _
    $region50: #{tpu_custom_call.1} parent=1 // pred_check_branch
      %423 = sbr.rel (0) target = $region52
    $region51: #{tpu_custom_call.1} parent=1 // pred_region
      %424 = dma.done [#allocation7], 128
    $region52: #{tpu_custom_call.1} parent=1 // pred_fallthru
      _
    // Predicated region
    $region53: #{tpu_custom_call.1} parent=1 // pred_check
      _
    $region54: #{tpu_custom_call.1} parent=1 // pred_check_branch
      %426 = sbr.rel (0) target = $region56
    $region55: #{tpu_custom_call.1} parent=1 // pred_region
      %427 = dma.done [#allocation13], 128
    $region56: #{tpu_custom_call.1} parent=1 // pred_fallthru
      _
    %428 = vsyncpa [#allocation6], 1
    %429 = vsyncpa [#allocation9], 1
    %430 = vsyncpa [#allocation7], 1
    %431 = vsyncpa [#allocation13], 1

// kernel: tpu_custom_call.1
$region0: #{tpu_custom_call.1}
  #allocation0 [shape = 'u32[]', space=smem, size = 0x4, offset = 0x4, fixed_abs, tag = 'smem constant byte address 0x4 - core index']
  #allocation1 [shape = 'u32[144,128]{1,0:T(1,128)}', space=vmem, size = 0x12000, scoped, tag = 'internal scratch']
  #allocation2 [shape = 'f32[8,128]{1,0:T(8,128)}', space=vmem, size = 0x1000, scoped, tag = 'scratch operand']
  #allocation3 [shape = 's32[1]{0}', space=sflag, size = 0x4, scoped, tag = 'scoped memory for tpu_custom_call.1']
  #allocation4 [shape = 'u8[4096]{0}', space=smem, size = 0x1000, scoped, tag = 'prefetched SMEM operand 0']
  %s0 = inlined_call_operand.hbm [shape: s32[8,16], index: 0, kind: input, shape index: {}]
  %s1 = inlined_call_operand.hbm [shape: f32[56,128], index: 1, kind: input, shape index: {}]
  %s2 = inlined_call_operand.hbm [shape: bf16[128,128], index: 2, kind: input, shape index: {}]
  %s3 = inlined_call_operand.vmem [shape: f32[1,128], index: 3, kind: input, shape index: {}]
  %s4 = inlined_call_operand.hbm [shape: bf16[128,128], index: 4, kind: input, shape index: {}]
  %s5 = inlined_call_operand.vmem [shape: f32[1,128], index: 5, kind: input, shape index: {}]
  %s6 = inlined_call_operand.hbm [shape: f32[8,128], index: 6, kind: output, shape index: {0}]
  %s7 = inlined_call_operand.hbm [shape: f32[8,128], index: 7, kind: output, shape index: {1}]
  %8 = xla_tuple %s6, %s7
  %s9 = sld [smem:[#allocation0]]
  $region57: #{tpu_custom_call.1} parent=0
    _
  %s11 = ssub.s32 1, %s9
  %s12 = scalar_select 0, %s11, %s9
  %14 = dma.hbm_to_smem %s0, 128, [#allocation4], [#allocation3]
  %15 = dma.done [#allocation3], 128
  %16 = sfence
  $region1: #{tpu_custom_call.1} parent=0
    #allocation5 [shape = 'u8[28672]{0}', space=vmem, size = 0x7000, scoped, tag = 'input window, operand 1, single buffered']
    #allocation6 [shape = 's32[1]{0}', space=sflag, size = 0x4, scoped, tag = 'scoped memory for tpu_custom_call.1']
    #allocation7 [shape = 's32[1]{0}', space=sflag, size = 0x4, scoped, tag = 'scoped memory for tpu_custom_call.1']
    #allocation8 [shape = 'u8[32768]{0}', space=vmem, size = 0x8000, scoped, tag = 'input window, operand 2, single buffered']
    #allocation9 [shape = 's32[1]{0}', space=sflag, size = 0x4, scoped, tag = 'scoped memory for tpu_custom_call.1']
    #allocation10 [shape = 'u8[32768]{0}', space=vmem, size = 0x8000, scoped, tag = 'input window, operand 4, single buffered']
    #allocation11 [shape = 'u8[4096]{0}', space=vmem, size = 0x1000, scoped, tag = 'output window, operand 0, single buffered']
    #allocation12 [shape = 'u8[4096]{0}', space=vmem, size = 0x1000, scoped, tag = 'output window, operand 1, single buffered']
    #allocation13 [shape = 's32[1]{0}', space=sflag, size = 0x4, scoped, tag = 'scoped memory for tpu_custom_call.1']
    %17 = vsyncpa [#allocation6], 0
    %18 = vsyncpa [#allocation9], 0
    %19 = vsyncpa [#allocation7], 0
    %20 = vsyncpa [#allocation13], 0
    // Predicated region
    $region2: #{tpu_custom_call.1} parent=1 // pred_check
      _
    $region3: #{tpu_custom_call.1} parent=1 // pred_check_branch
      %22 = sbr.rel (0) target = $region5
    $region4: #{tpu_custom_call.1} parent=1 // pred_region
      %s24 = ssub.s32 896, 896
      %25 = vsyncadd [#allocation6], %s24
      %s26 = sshll.u32 [#allocation5], 4
      %s27 = int_to_ptr.vmem [resolvable:$true] %s26
      %32 = dma.hbm_to_vmem [thread:$0]  %s1, 896, %s27, [#allocation6], 128, 128, 8
    $region5: #{tpu_custom_call.1} parent=1 // pred_fallthru
      _
    // Predicated region
    $region6: #{tpu_custom_call.1} parent=1 // pred_check
      _
    $region7: #{tpu_custom_call.1} parent=1 // pred_check_branch
      %34 = sbr.rel (0) target = $region9
    $region8: #{tpu_custom_call.1} parent=1 // pred_region
      %s36 = ssub.s32 1024, 1024
      %37 = vsyncadd [#allocation9], %s36
      %s38 = sshll.u32 [#allocation8], 4
      %s39 = int_to_ptr.vmem [resolvable:$true] %s38
      %44 = dma.hbm_to_vmem [thread:$0]  %s2, 1024, %s39, [#allocation9], 64, 64, 4
    $region9: #{tpu_custom_call.1} parent=1 // pred_fallthru
      _
    // Predicated region
    $region10: #{tpu_custom_call.1} parent=1 // pred_check
      _
    $region11: #{tpu_custom_call.1} parent=1 // pred_check_branch
      %46 = sbr.rel (0) target = $region13
    $region12: #{tpu_custom_call.1} parent=1 // pred_region
      _
    $region13: #{tpu_custom_call.1} parent=1 // pred_fallthru
      _
    // Predicated region
    $region14: #{tpu_custom_call.1} parent=1 // pred_check
      _
    $region15: #{tpu_custom_call.1} parent=1 // pred_check_branch
      %48 = sbr.rel (0) target = $region17
    $region16: #{tpu_custom_call.1} parent=1 // pred_region
      %s50 = ssub.s32 1024, 1024
      %51 = vsyncadd [#allocation9], %s50
      %s52 = sshll.u32 [#allocation10], 4
      %s53 = int_to_ptr.vmem [resolvable:$true] %s52
      %58 = dma.hbm_to_vmem [thread:$0]  %s4, 1024, %s53, [#allocation9], 64, 64, 4
    $region17: #{tpu_custom_call.1} parent=1 // pred_fallthru
      _
    // Predicated region
    $region18: #{tpu_custom_call.1} parent=1 // pred_check
      _
    $region19: #{tpu_custom_call.1} parent=1 // pred_check_branch
      %60 = sbr.rel (0) target = $region21
    $region20: #{tpu_custom_call.1} parent=1 // pred_region
      _
    $region21: #{tpu_custom_call.1} parent=1 // pred_fallthru
      _
    // Predicated region
    $region22: #{tpu_custom_call.1} parent=1 // pred_check
      _
    $region23: #{tpu_custom_call.1} parent=1 // pred_check_branch
      %62 = sbr.rel (0) target = $region25
    $region24: #{tpu_custom_call.1} parent=1 // pred_region
      %63 = dma.done [#allocation6], 896
    $region25: #{tpu_custom_call.1} parent=1 // pred_fallthru
      _
    // Predicated region
    $region26: #{tpu_custom_call.1} parent=1 // pred_check
      _
    $region27: #{tpu_custom_call.1} parent=1 // pred_check_branch
      %65 = sbr.rel (0) target = $region29
    $region28: #{tpu_custom_call.1} parent=1 // pred_region
      %66 = dma.done [#allocation9], 1024
    $region29: #{tpu_custom_call.1} parent=1 // pred_fallthru
      _
    // Predicated region
    $region30: #{tpu_custom_call.1} parent=1 // pred_check
      _
    $region31: #{tpu_custom_call.1} parent=1 // pred_check_branch
      %68 = sbr.rel (0) target = $region33
    $region32: #{tpu_custom_call.1} parent=1 // pred_region
      %69 = dma.done [#allocation9], 1024
    $region33: #{tpu_custom_call.1} parent=1 // pred_fallthru
      _
    %s71 = smul.u32 0, 8
    loop: start=0, step=1, limit=8
    $region34: #{tpu_custom_call.1} parent=1 // loop_pre_header
      _
    $region35: #{tpu_custom_call.1} parent=1 // loop_header
      %s73 = sphi 0, %s77
      %p74 = scmp.ge.s32.totalorder %s73, 8
    $region36: #{tpu_custom_call.1} parent=1 // loop_header_branch
      %76 = sbr.rel (%p74) target = $region40
    $region37: #{tpu_custom_call.1} parent=1 // loop_body
      %s78 = sadd.s32 %s71, %s73
      %s79 = smul.u32 %s78, 128
      %s80 = sld [smem:[#allocation4 + %s79]]
      %s81 = scalar_lea.vmem [#allocation5], %s80
      %v82 = vld [vmem:[%s81] sm:$0x1]
      %v83 = vadd.f32 %v82, 0.0
      %s84 = sadd.s32 %s79, 1
      %s85 = sld [smem:[#allocation4 + %s84]]
      %s86 = scalar_lea.vmem [#allocation5], %s85
      %v87 = vld [vmem:[%s86] sm:$0x1]
      %v88 = vadd.f32 %v83, %v87
      %s89 = sadd.s32 %s79, 2
      %s90 = sld [smem:[#allocation4 + %s89]]
      %s91 = scalar_lea.vmem [#allocation5], %s90
      %v92 = vld [vmem:[%s91] sm:$0x1]
      %v93 = vadd.f32 %v88, %v92
      %s94 = sadd.s32 %s79, 3
      %s95 = sld [smem:[#allocation4 + %s94]]
      %s96 = scalar_lea.vmem [#allocation5], %s95
      %v97 = vld [vmem:[%s96] sm:$0x1]
      %v98 = vadd.f32 %v93, %v97
      %s99 = sadd.s32 %s79, 4
      %s100 = sld [smem:[#allocation4 + %s99]]
      %s101 = scalar_lea.vmem [#allocation5], %s100
      %v102 = vld [vmem:[%s101] sm:$0x1]
      %v103 = vadd.f32 %v98, %v102
      %s104 = sadd.s32 %s79, 5
      %s105 = sld [smem:[#allocation4 + %s104]]
      %s106 = scalar_lea.vmem [#allocation5], %s105
      %v107 = vld [vmem:[%s106] sm:$0x1]
      %v108 = vadd.f32 %v103, %v107
      %s109 = sadd.s32 %s79, 6
      %s110 = sld [smem:[#allocation4 + %s109]]
      %s111 = scalar_lea.vmem [#allocation5], %s110
      %v112 = vld [vmem:[%s111] sm:$0x1]
      %v113 = vadd.f32 %v108, %v112
      %s114 = sadd.s32 %s79, 7
      %s115 = sld [smem:[#allocation4 + %s114]]
      %s116 = scalar_lea.vmem [#allocation5], %s115
      %v117 = vld [vmem:[%s116] sm:$0x1]
      %v118 = vadd.f32 %v113, %v117
      %s119 = sadd.s32 %s79, 8
      %s120 = sld [smem:[#allocation4 + %s119]]
      %s121 = scalar_lea.vmem [#allocation5], %s120
      %v122 = vld [vmem:[%s121] sm:$0x1]
      %v123 = vadd.f32 %v118, %v122
      %s124 = sadd.s32 %s79, 9
      %s125 = sld [smem:[#allocation4 + %s124]]
      %s126 = scalar_lea.vmem [#allocation5], %s125
      %v127 = vld [vmem:[%s126] sm:$0x1]
      %v128 = vadd.f32 %v123, %v127
      %s129 = sadd.s32 %s79, 10
      %s130 = sld [smem:[#allocation4 + %s129]]
      %s131 = scalar_lea.vmem [#allocation5], %s130
      %v132 = vld [vmem:[%s131] sm:$0x1]
      %v133 = vadd.f32 %v128, %v132
      %s134 = sadd.s32 %s79, 11
      %s135 = sld [smem:[#allocation4 + %s134]]
      %s136 = scalar_lea.vmem [#allocation5], %s135
      %v137 = vld [vmem:[%s136] sm:$0x1]
      %v138 = vadd.f32 %v133, %v137
      %s139 = sadd.s32 %s79, 12
      %s140 = sld [smem:[#allocation4 + %s139]]
      %s141 = scalar_lea.vmem [#allocation5], %s140
      %v142 = vld [vmem:[%s141] sm:$0x1]
      %v143 = vadd.f32 %v138, %v142
      %s144 = sadd.s32 %s79, 13
      %s145 = sld [smem:[#allocation4 + %s144]]
      %s146 = scalar_lea.vmem [#allocation5], %s145
      %v147 = vld [vmem:[%s146] sm:$0x1]
      %v148 = vadd.f32 %v143, %v147
      %s149 = sadd.s32 %s79, 14
      %s150 = sld [smem:[#allocation4 + %s149]]
      %s151 = scalar_lea.vmem [#allocation5], %s150
      %v152 = vld [vmem:[%s151] sm:$0x1]
      %v153 = vadd.f32 %v148, %v152
      %s154 = sadd.s32 %s79, 15
      %s155 = sld [smem:[#allocation4 + %s154]]
      %s156 = scalar_lea.vmem [#allocation5], %s155
      %v157 = vld [vmem:[%s156] sm:$0x1]
      %v158 = vadd.f32 %v153, %v157
      %v159 = vmul.f32 %v158, 0.0625
      %s160 = scalar_lea.vmem [#allocation2], %s73
      %161 = vst [vmem:[%s160] sm:$0x1] %v159
    $region38: #{tpu_custom_call.1} parent=1 // loop_footer
      %s77 = sadd.s32 1, %s73
    $region39: #{tpu_custom_call.1} parent=1 // loop_footer_branch
      %72 = sbr.rel target = $region35
    $region40: #{tpu_custom_call.1} parent=1 // loop_exit
      _
    %v162 = vld [vmem:[#allocation2] sm:$0xff]
    %v163 = vpack.c.bf16 %v162, %v162
    %v164 = vld [vmem:[#allocation8] sm:$0xf]
    %v165 = vld [vmem:[#allocation8 + $0x4] sm:$0xf]
    %v166 = vld [vmem:[#allocation8 + $0x8] sm:$0xf]
    %v167 = vld [vmem:[#allocation8 + $0xc] sm:$0xf]
    %v168 = vld [vmem:[#allocation8 + $0x10] sm:$0xf]
    %v169 = vld [vmem:[#allocation8 + $0x14] sm:$0xf]
    %v170 = vld [vmem:[#allocation8 + $0x18] sm:$0xf]
    %v171 = vld [vmem:[#allocation8 + $0x1c] sm:$0xf]
    %v172 = vld [vmem:[#allocation8 + $0x20] sm:$0xf]
    %v173 = vld [vmem:[#allocation8 + $0x24] sm:$0xf]
    %v174 = vld [vmem:[#allocation8 + $0x28] sm:$0xf]
    %v175 = vld [vmem:[#allocation8 + $0x2c] sm:$0xf]
    %v176 = vld [vmem:[#allocation8 + $0x30] sm:$0xf]
    %v177 = vld [vmem:[#allocation8 + $0x34] sm:$0xf]
    %v178 = vld [vmem:[#allocation8 + $0x38] sm:$0xf]
    %v179 = vld [vmem:[#allocation8 + $0x3c] sm:$0xf]
    %v180 = vld [vmem:[%s3] sm:$0x1]
    %v182 = vlaneseq
    %v183 = vshrl.u32 %v182, 7
    %v184 = vsub.s32 0, %v183
    %v185 = vrot.slane %v180, %v184
    %v203 = vunpack.c.l.b16 %v164
    %v204 = vunpack.c.l.b16 %v165
    %v205 = vunpack.c.l.b16 %v166
    %v206 = vunpack.c.l.b16 %v167
    %v207 = vunpack.c.l.b16 %v168
    %v208 = vunpack.c.l.b16 %v169
    %v209 = vunpack.c.l.b16 %v170
    %v210 = vunpack.c.l.b16 %v171
    %v211 = vunpack.c.l.b16 %v172
    %v212 = vunpack.c.l.b16 %v173
    %v213 = vunpack.c.l.b16 %v174
    %v214 = vunpack.c.l.b16 %v175
    %v215 = vunpack.c.l.b16 %v176
    %v216 = vunpack.c.l.b16 %v177
    %v217 = vunpack.c.l.b16 %v178
    %v218 = vunpack.c.l.b16 %v179
    %v219 = vpack.c.b16 %v204, %v203
    %v220 = vpack.c.b16 %v206, %v205
    %v221 = vpack.c.b16 %v208, %v207
    %v222 = vpack.c.b16 %v210, %v209
    %v223 = vpack.c.b16 %v212, %v211
    %v224 = vpack.c.b16 %v214, %v213
    %v225 = vpack.c.b16 %v216, %v215
    %v226 = vpack.c.b16 %v218, %v217
    %235 = vmatprep.subr.bf16.mxu0 0
    %236 = vmatpush1.bf16.msra.mxu0 %v219
    %237 = vmatprep.subr.bf16.mxu0 0
    %238 = vmatpush1.bf16.msra.mxu0 %v220
    %239 = vmatprep.subr.bf16.mxu0 0
    %240 = vmatpush1.bf16.msra.mxu0 %v221
    %241 = vmatprep.subr.bf16.mxu0 0
    %242 = vmatpush1.bf16.msra.mxu0 %v222
    %243 = vmatprep.subr.bf16.mxu0 0
    %244 = vmatpush1.bf16.msra.mxu0 %v223
    %245 = vmatprep.subr.bf16.mxu0 0
    %246 = vmatpush1.bf16.msra.mxu0 %v224
    %247 = vmatprep.subr.bf16.mxu0 0
    %248 = vmatpush1.bf16.msra.mxu0 %v225
    %249 = vmatprep.subr.bf16.mxu0 0
    %250 = vmatpush1.bf16.msra.mxu0 %v226
    %251 = vmatprep.subr.bf16.mxu0 0
    %252 = vmatpush1.bf16.msra.mxu0 0
    %253 = vmatprep.subr.bf16.mxu0 0
    %254 = vmatpush1.bf16.msra.mxu0 0
    %255 = vmatprep.subr.bf16.mxu0 0
    %256 = vmatpush1.bf16.msra.mxu0 0
    %257 = vmatprep.subr.bf16.mxu0 0
    %258 = vmatpush1.bf16.msra.mxu0 0
    %259 = vmatprep.subr.bf16.mxu0 0
    %260 = vmatpush1.bf16.msra.mxu0 0
    %261 = vmatprep.subr.bf16.mxu0 0
    %262 = vmatpush1.bf16.msra.mxu0 0
    %263 = vmatprep.subr.bf16.mxu0 0
    %264 = vmatpush1.bf16.msra.mxu0 0
    %265 = vmatprep.subr.bf16.mxu0 0
    %266 = vmatpush1.bf16.msra.mxu0 0
    %267 = vmatprep.mubr.bf16.mxu0 0
    %268 = vmatmul.mubr.bf16.gmra.mrb[0].mxu0 %v163
    %v269 = vpop.f32.mrb[0].mxu0
    %v270 = vadd.f32 %v185, %v269
    %v271 = vpop.f32.mrb[0].mxu0
    %v272 = vpop.f32.mrb[0].mxu0
    %v273 = vpop.f32.mrb[0].mxu0
    %274 = vdwg.mxu0
    %v275 = vmax.f32 %v270, 0.0
    %v276 = vpack.c.bf16 %v275, %v275
    %v277 = vld [vmem:[#allocation10] sm:$0xf]
    %v278 = vld [vmem:[#allocation10 + $0x4] sm:$0xf]
    %v279 = vld [vmem:[#allocation10 + $0x8] sm:$0xf]
    %v280 = vld [vmem:[#allocation10 + $0xc] sm:$0xf]
    %v281 = vld [vmem:[#allocation10 + $0x10] sm:$0xf]
    %v282 = vld [vmem:[#allocation10 + $0x14] sm:$0xf]
    %v283 = vld [vmem:[#allocation10 + $0x18] sm:$0xf]
    %v284 = vld [vmem:[#allocation10 + $0x1c] sm:$0xf]
    %v285 = vld [vmem:[#allocation10 + $0x20] sm:$0xf]
    %v286 = vld [vmem:[#allocation10 + $0x24] sm:$0xf]
    %v287 = vld [vmem:[#allocation10 + $0x28] sm:$0xf]
    %v288 = vld [vmem:[#allocation10 + $0x2c] sm:$0xf]
    %v289 = vld [vmem:[#allocation10 + $0x30] sm:$0xf]
    %v290 = vld [vmem:[#allocation10 + $0x34] sm:$0xf]
    %v291 = vld [vmem:[#allocation10 + $0x38] sm:$0xf]
    %v292 = vld [vmem:[#allocation10 + $0x3c] sm:$0xf]
    %v293 = vld [vmem:[%s5] sm:$0x1]
    %v295 = vlaneseq
    %v296 = vshrl.u32 %v295, 7
    %v297 = vsub.s32 0, %v296
    %v298 = vrot.slane %v293, %v297
    %v316 = vunpack.c.l.b16 %v277
    %v317 = vunpack.c.l.b16 %v278
    %v318 = vunpack.c.l.b16 %v279
    %v319 = vunpack.c.l.b16 %v280
    %v320 = vunpack.c.l.b16 %v281
    %v321 = vunpack.c.l.b16 %v282
    %v322 = vunpack.c.l.b16 %v283
    %v323 = vunpack.c.l.b16 %v284
    %v324 = vunpack.c.l.b16 %v285
    %v325 = vunpack.c.l.b16 %v286
    %v326 = vunpack.c.l.b16 %v287
    %v327 = vunpack.c.l.b16 %v288
    %v328 = vunpack.c.l.b16 %v289
    %v329 = vunpack.c.l.b16 %v290
    %v330 = vunpack.c.l.b16 %v291
    %v331 = vunpack.c.l.b16 %v292
    %v332 = vpack.c.b16 %v317, %v316
    %v333 = vpack.c.b16 %v319, %v318
    %v334 = vpack.c.b16 %v321, %v320
    %v335 = vpack.c.b16 %v323, %v322
    %v336 = vpack.c.b16 %v325, %v324
    %v337 = vpack.c.b16 %v327, %v326
    %v338 = vpack.c.b16 %v329, %v328
    %v339 = vpack.c.b16 %v331, %v330
    %348 = vmatprep.subr.bf16.mxu0 0
    %349 = vmatpush1.bf16.msra.mxu0 %v332
    %350 = vmatprep.subr.bf16.mxu0 0
    %351 = vmatpush1.bf16.msra.mxu0 %v333
    %352 = vmatprep.subr.bf16.mxu0 0
    %353 = vmatpush1.bf16.msra.mxu0 %v334
    %354 = vmatprep.subr.bf16.mxu0 0
    %355 = vmatpush1.bf16.msra.mxu0 %v335
    %356 = vmatprep.subr.bf16.mxu0 0
    %357 = vmatpush1.bf16.msra.mxu0 %v336
    %358 = vmatprep.subr.bf16.mxu0 0
    %359 = vmatpush1.bf16.msra.mxu0 %v337
    %360 = vmatprep.subr.bf16.mxu0 0
    %361 = vmatpush1.bf16.msra.mxu0 %v338
    %362 = vmatprep.subr.bf16.mxu0 0
    %363 = vmatpush1.bf16.msra.mxu0 %v339
    %364 = vmatprep.subr.bf16.mxu0 0
    %365 = vmatpush1.bf16.msra.mxu0 0
    %366 = vmatprep.subr.bf16.mxu0 0
    %367 = vmatpush1.bf16.msra.mxu0 0
    %368 = vmatprep.subr.bf16.mxu0 0
    %369 = vmatpush1.bf16.msra.mxu0 0
    %370 = vmatprep.subr.bf16.mxu0 0
    %371 = vmatpush1.bf16.msra.mxu0 0
    %372 = vmatprep.subr.bf16.mxu0 0
    %373 = vmatpush1.bf16.msra.mxu0 0
    %374 = vmatprep.subr.bf16.mxu0 0
    %375 = vmatpush1.bf16.msra.mxu0 0
    %376 = vmatprep.subr.bf16.mxu0 0
    %377 = vmatpush1.bf16.msra.mxu0 0
    %378 = vmatprep.subr.bf16.mxu0 0
    %379 = vmatpush1.bf16.msra.mxu0 0
    %380 = vmatprep.mubr.bf16.mxu0 0
    %381 = vmatmul.mubr.bf16.gmra.mrb[0].mxu0 %v276
    %v382 = vpop.f32.mrb[0].mxu0
    %v383 = vadd.f32 %v298, %v382
    %v384 = vpop.f32.mrb[0].mxu0
    %v385 = vpop.f32.mrb[0].mxu0
    %v386 = vpop.f32.mrb[0].mxu0
    %387 = vdwg.mxu0
    %388 = vmax.xlane.f32.xlu0 %v383
    %v389 = vpop.xlane.xlu0 %388
    %v390 = vsub.f32 %v383, %v389
    %v391 = vmul.f32 %v390, 1.442695
    %v392 = vpow.pop %v391
    %393 = vadd.xlane.f32.xlu0 %v392
    %v394 = vpop.xlane.xlu0 %393
    %v395 = vrcp.pop %v394
    %v396 = vmul.f32 %v394, %v395
    %v397 = vsub.f32 2.0, %v396
    %v398 = vmul.f32 %v395, %v397
    %v399 = vmul.f32 %v392, %v398
    %400 = vst [vmem:[#allocation11] sm:$0xff] %v399
    %401 = vst [vmem:[#allocation12] sm:$0xff] %v275
    // Predicated region
    $region41: #{tpu_custom_call.1} parent=1 // pred_check
      _
    $region42: #{tpu_custom_call.1} parent=1 // pred_check_branch
      %403 = sbr.rel (0) target = $region44
    $region43: #{tpu_custom_call.1} parent=1 // pred_region
      %s405 = ssub.s32 128, 128
      %406 = vsyncadd [#allocation7], %s405
      %s408 = sshll.u32 [#allocation11], 4
      %s409 = int_to_ptr.vmem [resolvable:$true] %s408
      %411 = dma.vmem_to_hbm [thread:$0]  %s409, 128, %s6, [#allocation7]
    $region44: #{tpu_custom_call.1} parent=1 // pred_fallthru
      _
    // Predicated region
    $region45: #{tpu_custom_call.1} parent=1 // pred_check
      _
    $region46: #{tpu_custom_call.1} parent=1 // pred_check_branch
      %413 = sbr.rel (0) target = $region48
    $region47: #{tpu_custom_call.1} parent=1 // pred_region
      %s415 = ssub.s32 128, 128
      %416 = vsyncadd [#allocation13], %s415
      %s418 = sshll.u32 [#allocation12], 4
      %s419 = int_to_ptr.vmem [resolvable:$true] %s418
      %421 = dma.vmem_to_hbm [thread:$0]  %s419, 128, %s7, [#allocation13]
    $region48: #{tpu_custom_call.1} parent=1 // pred_fallthru
      _
    // Predicated region
    $region49: #{tpu_custom_call.1} parent=1 // pred_check
      _
    $region50: #{tpu_custom_call.1} parent=1 // pred_check_branch
      %423 = sbr.rel (0) target = $region52
    $region51: #{tpu_custom_call.1} parent=1 // pred_region
      %424 = dma.done [#allocation7], 128
    $region52: #{tpu_custom_call.1} parent=1 // pred_fallthru
      _
    // Predicated region
    $region53: #{tpu_custom_call.1} parent=1 // pred_check
      _
    $region54: #{tpu_custom_call.1} parent=1 // pred_check_branch
      %426 = sbr.rel (0) target = $region56
    $region55: #{tpu_custom_call.1} parent=1 // pred_region
      %427 = dma.done [#allocation13], 128
    $region56: #{tpu_custom_call.1} parent=1 // pred_fallthru
      _
    %428 = vsyncpa [#allocation6], 1
    %429 = vsyncpa [#allocation9], 1
    %430 = vsyncpa [#allocation7], 1
    %431 = vsyncpa [#allocation13], 1

</llo_original>
